<compile_context>
chip_gen: v5e
topology: v5e:2x2
jax: 0.10.0
libtpu: 0.0.40
codegen_flags: <defaults>
</compile_context>

<pallas_src>
import functools

import jax
import jax.numpy as jnp
from jax import lax
from jax.experimental import pallas as pl
from jax.experimental.pallas import tpu as pltpu

NEG_SLOPE = 0.01  # nn.LeakyReLU default negative_slope


def _leaky(v):
    return jnp.where(v > 0, v, NEG_SLOPE * v)


# --------------------------------------------------------------------------- #
# Fused kernel: point-embedder MLP + mean over points + anchor-selector MLP,
# for a block of Bt batches per grid step.
# --------------------------------------------------------------------------- #
def anchor_selector_kernel(x_ref, p_ref, out_ref, *, dims, offsets,
                           n_embed_layers, n_points_pad, n_points_valid,
                           in_dims, use_bf16):
    Bt = x_ref.shape[0]
    N_pad = n_points_pad
    D = in_dims
    mm_dtype = jnp.bfloat16 if use_bf16 else jnp.float32

    def w_and_b(i):
        fin, fout = dims[i]
        off = offsets[i]
        W = p_ref[pl.ds(off, fin), pl.ds(0, fout)]
        b = p_ref[pl.ds(off + fin, 1), pl.ds(0, fout)]
        return W, b

    def matmul(a, W):
        # Optionally run the MXU in bf16 (f32 accumulation); biases stay f32.
        return jnp.dot(a.astype(mm_dtype), W.astype(mm_dtype),
                       preferred_element_type=jnp.float32)

    # ---- embedder layer 0 as rank-1 broadcast FMAs (avoid a K=D MXU matmul) ----
    # x arrives lane-dense as (Bt, N*D); rebuild the (Bt, N, D) view in-kernel.
    x = x_ref[...].reshape(Bt, N_pad, D)
    fin0, fout0 = dims[0]
    off0 = offsets[0]
    h = p_ref[pl.ds(off0 + fin0, 1), pl.ds(0, fout0)].reshape(1, 1, fout0)   # bias
    for d in range(fin0):                                        # D is 2 or 3, static
        w_row = p_ref[pl.ds(off0 + d, 1), pl.ds(0, fout0)].reshape(1, 1, fout0)
        h = h + x[:, :, d:d + 1] * w_row
    h = _leaky(h)                                                # (Bt, N_pad, H0)
    h = h.reshape(Bt * N_pad, fout0)                             # N_pad % 8 == 0 -> free

    # ---- remaining embedder hidden layers: one big (Bt*N, H) matmul each ----
    for i in range(1, n_embed_layers - 1):
        W, b = w_and_b(i)
        h = _leaky(matmul(h, W) + b)

    # ---- mean over points with the final embedder linear hoisted past it ----
    #      mean(h @ W + b) == mean(h) @ W + b   (no activation after this layer)
    h3 = h.reshape(Bt, N_pad, h.shape[-1])
    if n_points_valid == N_pad:
        hm = jnp.mean(h3, axis=1)                                # (Bt, H)
    else:
        # N was padded to a multiple of 8: mask the padded points out of the mean.
        mask = (lax.broadcasted_iota(jnp.int32, (1, N_pad, 1), 1)
                < n_points_valid).astype(jnp.float32)
        hm = jnp.sum(h3 * mask, axis=1) * (1.0 / n_points_valid)
    W, b = w_and_b(n_embed_layers - 1)
    g = matmul(hm, W) + b                                        # (Bt, E)

    # ---- anchor-selector MLP on the whole (Bt, E) batch block ----
    a = g
    for i in range(n_embed_layers, len(dims) - 1):
        W, b = w_and_b(i)
        a = _leaky(matmul(a, W) + b)
    W, b = w_and_b(len(dims) - 1)
    out_ref[...] = (matmul(a, W) + b).astype(out_ref.dtype)      # (Bt, out_pad)


# --------------------------------------------------------------------------- #
# Pack all (W, b) pairs into one sublane-aligned, 128-lane-wide f32 slab.
# The final layer's fout is padded up to a multiple of 128 (extra cols are zero)
# so the kernel's output stores are lane-dense and unmasked.
# --------------------------------------------------------------------------- #
def pack_params(layers, *, min_width=128, pad_last_to=128):
    n = len(layers)
    padded_fouts = []
    for i, (W, _) in enumerate(layers):
        fout = int(W.shape[1])
        if i == n - 1:
            fout = ((fout + pad_last_to - 1) // pad_last_to) * pad_last_to
        padded_fouts.append(fout)
    width = max(min_width, max(padded_fouts))

    blocks, offsets, dims = [], [], []
    row = 0
    for i, (W, b) in enumerate(layers):
        fin, fout = int(W.shape[0]), int(W.shape[1])
        rows_p = ((fin + 1 + 7) // 8) * 8                        # 8-row aligned block
        blk = jnp.zeros((rows_p, width), jnp.float32)
        blk = blk.at[:fin, :fout].set(W.astype(jnp.float32))
        blk = blk.at[fin, :fout].set(b.astype(jnp.float32))
        blocks.append(blk)
        offsets.append(row)
        dims.append((fin, padded_fouts[i]))
        row += rows_p
    return jnp.concatenate(blocks, axis=0), tuple(offsets), tuple(dims)


# --------------------------------------------------------------------------- #
# Batch-block selection: big enough to fill the MXU / amortize per-step overhead,
# but never more than ceil(B/2) so the grid keeps >= 2 steps (v7x has 2 TCs).
# --------------------------------------------------------------------------- #
def _choose_block_b(B, max_block=256):
    if B <= 8:
        return 8
    half = -(-B // 2)                     # ceil(B / 2)  -> grid >= 2 steps
    bt = ((half + 7) // 8) * 8            # sublane-aligned
    return max(8, min(bt, max_block))


# --------------------------------------------------------------------------- #
# Wrapper
# --------------------------------------------------------------------------- #
def anchor_selector_forward(x, embed_layers, selector_layers, *,
                            num_anchors, num_input_dims, block_b=None,
                            use_bf16=None):
    B, N, D = x.shape
    assert D == num_input_dims
    if num_input_dims == 2:
        nod = num_input_dims + 1
    elif num_input_dims == 3:
        nod = num_input_dims + 2
    else:
        raise ValueError("Only 2D and 3D point clouds supported")

    layers = list(embed_layers) + list(selector_layers)
    packed, offsets, dims = pack_params(layers)
    out_w = num_anchors * nod
    out_pad = dims[-1][1]                                        # 128-lane padded
    assert int(selector_layers[-1][0].shape[1]) == out_w

    # Batch / point padding (padded batches are sliced off; padded points masked).
    Bt = _choose_block_b(B) if block_b is None else block_b
    B_pad = ((B + Bt - 1) // Bt) * Bt
    N_pad = ((N + 7) // 8) * 8
    if use_bf16 is None:
        use_bf16 = (Bt * N_pad) >= 2048          # only once the MXU is actually fed

    if B_pad != B or N_pad != N:
        x = jnp.pad(x, ((0, B_pad - B), (0, N_pad - N), (0, 0)))
    x_flat = x.reshape(B_pad, N_pad * D)         # lane-dense DMA layout

    kernel = functools.partial(
        anchor_selector_kernel, dims=dims, offsets=offsets,
        n_embed_layers=len(embed_layers), n_points_pad=N_pad,
        n_points_valid=N, in_dims=D, use_bf16=use_bf16)

    # Advisory cost estimate so XLA schedules/overlaps this call sensibly.
    h0 = int(embed_layers[0][0].shape[1])
    per_point = 2 * D * h0
    for i in range(1, len(embed_layers) - 1):
        Wi = embed_layers[i][0]
        per_point += 2 * int(Wi.shape[0]) * int(Wi.shape[1])
    per_batch = 2 * int(embed_layers[-1][0].shape[0]) * int(embed_layers[-1][0].shape[1])
    for W, _ in selector_layers:
        per_batch += 2 * int(W.shape[0]) * int(W.shape[1])
    cost = pl.CostEstimate(
        flops=int(B_pad * (N_pad * per_point + per_batch)),
        transcendentals=0,
        bytes_accessed=int(4 * (B_pad * N_pad * D + packed.size + B_pad * out_pad)))

    # VMEM budget with headroom (v7x: 64 MiB physical / 32 MiB default scoped).
    vmem_need = (2 * 4 * Bt * N_pad * D            # double-buffered x block
                 + 2 * 4 * Bt * out_pad            # double-buffered out block
                 + 4 * int(packed.size)            # resident param slab
                 + 4 * 4 * Bt * N_pad * h0         # h + layer-0 broadcast temps
                 + (4 << 20))
    vmem_limit = int(min(max(vmem_need, 16 << 20), 48 << 20))

    def run(p_spec):
        return pl.pallas_call(
            kernel,
            out_shape=jax.ShapeDtypeStruct((B_pad, out_pad), jnp.float32),
            grid_spec=pltpu.PrefetchScalarGridSpec(
                num_scalar_prefetch=0,
                grid=(B_pad // Bt,),
                in_specs=[
                    pl.BlockSpec((Bt, N_pad * D), lambda b: (b, 0)),
                    p_spec,                                   # resident param slab
                ],
                out_specs=pl.BlockSpec((Bt, out_pad), lambda b: (b, 0)),
            ),
            compiler_params=pltpu.CompilerParams(
                dimension_semantics=("parallel",),
                vmem_limit_bytes=vmem_limit),
            cost_estimate=cost,
        )(x_flat, packed)

    # Param slab is never refetched: single-buffer it when this jax supports it.
    try:
        out = run(pl.BlockSpec(packed.shape, lambda b: (0, 0),
                               pipeline_mode=pl.Buffered(1)))
    except Exception:
        out = run(pl.BlockSpec(packed.shape, lambda b: (0, 0)))

    return out[:B, :out_w].reshape(B, num_anchors, nod)


# --------------------------------------------------------------------------- #
# Deterministic parameter init (shapes from AnchorSelector.__init__ defaults)
# --------------------------------------------------------------------------- #
def init_params(key, D, A, nod, embed_hidden=(64, 64), embedding_size=32,
                anchor_hidden=(64, 64)):
    def mlp_dims(fin, hiddens, fout):
        d, prev = [], fin
        for h in hiddens:
            d.append((prev, h))
            prev = h
        d.append((prev, fout))
        return d

    embed_dims = mlp_dims(D, list(embed_hidden), embedding_size)
    sel_dims = mlp_dims(embedding_size, list(anchor_hidden), A * nod)
    all_dims = embed_dims + sel_dims
    keys = jax.random.split(key, 2 * len(all_dims))
    layers = []
    for i, (fin, fout) in enumerate(all_dims):
        bound = 1.0 / float(fin) ** 0.5
        W = jax.random.uniform(keys[2 * i], (fin, fout), jnp.float32, -bound, bound)
        b = jax.random.uniform(keys[2 * i + 1], (fout,), jnp.float32, -bound, bound)
        layers.append((W, b))
    return layers[:len(embed_dims)], layers[len(embed_dims):]


# --------------------------------------------------------------------------- #
# Pure-JAX reference (mirrors the PyTorch forward) for a correctness check
# --------------------------------------------------------------------------- #
def anchor_selector_ref(x, embed_layers, selector_layers, num_anchors, nod):
    h = x
    for i, (W, b) in enumerate(embed_layers):
        h = h @ W + b
        if i < len(embed_layers) - 1:
            h = _leaky(h)
    g = jnp.mean(h, axis=1)
    a = g
    for i, (W, b) in enumerate(selector_layers):
        a = a @ W + b
        if i < len(selector_layers) - 1:
            a = _leaky(a)
    return a.reshape(-1, num_anchors, nod)


if __name__ == "__main__":
    B, N, D, A = 12, 16, 2, 4          # batch, points, dims, anchors
    nod = D + 1
    key = jax.random.PRNGKey(0)
    kx, kp = jax.random.split(key)
    x = jax.random.normal(kx, (B, N, D), jnp.float32)
    embed_layers, sel_layers = init_params(kp, D, A, nod)

    out = anchor_selector_forward(x, embed_layers, sel_layers,
                                  num_anchors=A, num_input_dims=D)
    out = jax.block_until_ready(out)

    ref = anchor_selector_ref(x, embed_layers, sel_layers, A, nod)
    assert out.shape == (B, A, nod), out.shape
    assert jnp.allclose(out, ref, atol=1e-4, rtol=1e-4), \
        float(jnp.max(jnp.abs(out - ref)))
    print("KERNEL_OK")
</pallas_src>

<mosaic_0001>
module attributes {stable_mosaic.version = 11 : i64} {
  func.func @anchor_selector_kernel(%arg0: i32, %arg1: memref<8x32xf32, #tpu.memory_space<vmem>>, %arg2: memref<336x128xf32, #tpu.memory_space<vmem>>, %arg3: memref<8x128xf32, #tpu.memory_space<vmem>>) attributes {dimension_semantics = [#tpu.dimension_semantics<parallel>], iteration_bounds = array<i64: 2>, scalar_prefetch = 0 : i64, scratch_operands = 0 : i64, tpu.core_type = #tpu.core_type<tc>, window_params = [{transform_indices = @transform_0, window_bounds = array<i64: 8, 32>}, {pipeline_mode = #tpu.pipeline_mode<synchronous>, transform_indices = @transform_1, window_bounds = array<i64: 336, 128>}, {transform_indices = @transform_2, window_bounds = array<i64: 8, 128>}]} {
    %c0 = arith.constant 0 : index
    %c0_0 = arith.constant 0 : index
    %0 = vector.load %arg1[%c0, %c0_0] : memref<8x32xf32, #tpu.memory_space<vmem>>, vector<8x32xf32>
    %1 = vector.shape_cast %0 : vector<8x32xf32> to vector<8x16x2xf32>
    %c2 = arith.constant 2 : index
    %c0_1 = arith.constant 0 : index
    %2 = vector.load %arg2[%c2, %c0_1] : memref<336x128xf32, #tpu.memory_space<vmem>>, vector<1x64xf32>
    %3 = vector.shape_cast %2 : vector<1x64xf32> to vector<1x1x64xf32>
    %c0_2 = arith.constant 0 : index
    %c0_3 = arith.constant 0 : index
    %4 = vector.load %arg2[%c0_2, %c0_3] : memref<336x128xf32, #tpu.memory_space<vmem>>, vector<1x64xf32>
    %5 = vector.shape_cast %4 : vector<1x64xf32> to vector<1x1x64xf32>
    %6 = vector.extract_strided_slice %1 {offsets = [0, 0, 0], sizes = [8, 16, 1], strides = [1, 1, 1]} : vector<8x16x2xf32> to vector<8x16x1xf32>
    %7 = vector.broadcast %6 : vector<8x16x1xf32> to vector<8x16x64xf32>
    %8 = vector.broadcast %5 : vector<1x1x64xf32> to vector<8x16x64xf32>
    %9 = arith.mulf %7, %8 : vector<8x16x64xf32>
    %10 = vector.broadcast %3 : vector<1x1x64xf32> to vector<8x16x64xf32>
    %11 = arith.addf %10, %9 : vector<8x16x64xf32>
    %c1 = arith.constant 1 : index
    %c0_4 = arith.constant 0 : index
    %12 = vector.load %arg2[%c1, %c0_4] : memref<336x128xf32, #tpu.memory_space<vmem>>, vector<1x64xf32>
    %13 = vector.shape_cast %12 : vector<1x64xf32> to vector<1x1x64xf32>
    %14 = vector.extract_strided_slice %1 {offsets = [0, 0, 1], sizes = [8, 16, 1], strides = [1, 1, 1]} : vector<8x16x2xf32> to vector<8x16x1xf32>
    %15 = vector.broadcast %14 : vector<8x16x1xf32> to vector<8x16x64xf32>
    %16 = vector.broadcast %13 : vector<1x1x64xf32> to vector<8x16x64xf32>
    %17 = arith.mulf %15, %16 : vector<8x16x64xf32>
    %18 = arith.addf %11, %17 : vector<8x16x64xf32>
    %cst = arith.constant 0.000000e+00 : f32
    %19 = vector.broadcast %cst : f32 to vector<8x16x64xf32>
    %20 = arith.cmpf ogt, %18, %19 : vector<8x16x64xf32>
    %cst_5 = arith.constant 0.00999999977 : f32
    %21 = vector.broadcast %cst_5 : f32 to vector<8x16x64xf32>
    %22 = arith.mulf %21, %18 : vector<8x16x64xf32>
    %23 = arith.select %20, %18, %22 : vector<8x16x64xi1>, vector<8x16x64xf32>
    %24 = vector.shape_cast %23 : vector<8x16x64xf32> to vector<128x64xf32>
    %c8 = arith.constant 8 : index
    %c0_6 = arith.constant 0 : index
    %25 = vector.load %arg2[%c8, %c0_6] : memref<336x128xf32, #tpu.memory_space<vmem>>, vector<64x64xf32>
    %c72 = arith.constant 72 : index
    %c0_7 = arith.constant 0 : index
    %26 = vector.load %arg2[%c72, %c0_7] : memref<336x128xf32, #tpu.memory_space<vmem>>, vector<1x64xf32>
    %cst_8 = arith.constant dense<0.000000e+00> : vector<128x64xf32>
    %27 = tpu.matmul %24, %25, %cst_8 {dimension_numbers = #tpu.dot_dimension_numbers<[1], [0], [0], [1], [0, 0, 1, 1], [], []>} : vector<128x64xf32>, vector<64x64xf32>, vector<128x64xf32> -> vector<128x64xf32>
    %28 = vector.broadcast %26 : vector<1x64xf32> to vector<128x64xf32>
    %29 = arith.addf %27, %28 : vector<128x64xf32>
    %cst_9 = arith.constant 0.000000e+00 : f32
    %30 = vector.broadcast %cst_9 : f32 to vector<128x64xf32>
    %31 = arith.cmpf ogt, %29, %30 : vector<128x64xf32>
    %cst_10 = arith.constant 0.00999999977 : f32
    %32 = vector.broadcast %cst_10 : f32 to vector<128x64xf32>
    %33 = arith.mulf %32, %29 : vector<128x64xf32>
    %34 = arith.select %31, %29, %33 : vector<128x64xi1>, vector<128x64xf32>
    %35 = vector.shape_cast %34 : vector<128x64xf32> to vector<8x16x64xf32>
    %cst_11 = arith.constant dense<0.000000e+00> : vector<8x64xf32>
    %36 = vector.multi_reduction <add>, %35, %cst_11 [1] : vector<8x16x64xf32> to vector<8x64xf32>
    %cst_12 = arith.constant 1.600000e+01 : f32
    %37 = vector.broadcast %cst_12 : f32 to vector<8x64xf32>
    %38 = arith.divf %36, %37 : vector<8x64xf32>
    %c80 = arith.constant 80 : index
    %c0_13 = arith.constant 0 : index
    %39 = vector.load %arg2[%c80, %c0_13] : memref<336x128xf32, #tpu.memory_space<vmem>>, vector<64x32xf32>
    %c144 = arith.constant 144 : index
    %c0_14 = arith.constant 0 : index
    %40 = vector.load %arg2[%c144, %c0_14] : memref<336x128xf32, #tpu.memory_space<vmem>>, vector<1x32xf32>
    %cst_15 = arith.constant dense<0.000000e+00> : vector<8x32xf32>
    %41 = tpu.matmul %38, %39, %cst_15 {dimension_numbers = #tpu.dot_dimension_numbers<[1], [0], [0], [1], [0, 0, 1, 1], [], []>} : vector<8x64xf32>, vector<64x32xf32>, vector<8x32xf32> -> vector<8x32xf32>
    %42 = vector.broadcast %40 : vector<1x32xf32> to vector<8x32xf32>
    %43 = arith.addf %41, %42 : vector<8x32xf32>
    %c152 = arith.constant 152 : index
    %c0_16 = arith.constant 0 : index
    %44 = vector.load %arg2[%c152, %c0_16] : memref<336x128xf32, #tpu.memory_space<vmem>>, vector<32x64xf32>
    %c184 = arith.constant 184 : index
    %c0_17 = arith.constant 0 : index
    %45 = vector.load %arg2[%c184, %c0_17] : memref<336x128xf32, #tpu.memory_space<vmem>>, vector<1x64xf32>
    %cst_18 = arith.constant dense<0.000000e+00> : vector<8x64xf32>
    %46 = tpu.matmul %43, %44, %cst_18 {dimension_numbers = #tpu.dot_dimension_numbers<[1], [0], [0], [1], [0, 0, 1, 1], [], []>} : vector<8x32xf32>, vector<32x64xf32>, vector<8x64xf32> -> vector<8x64xf32>
    %47 = vector.broadcast %45 : vector<1x64xf32> to vector<8x64xf32>
    %48 = arith.addf %46, %47 : vector<8x64xf32>
    %cst_19 = arith.constant 0.000000e+00 : f32
    %49 = vector.broadcast %cst_19 : f32 to vector<8x64xf32>
    %50 = arith.cmpf ogt, %48, %49 : vector<8x64xf32>
    %cst_20 = arith.constant 0.00999999977 : f32
    %51 = vector.broadcast %cst_20 : f32 to vector<8x64xf32>
    %52 = arith.mulf %51, %48 : vector<8x64xf32>
    %53 = arith.select %50, %48, %52 : vector<8x64xi1>, vector<8x64xf32>
    %c192 = arith.constant 192 : index
    %c0_21 = arith.constant 0 : index
    %54 = vector.load %arg2[%c192, %c0_21] : memref<336x128xf32, #tpu.memory_space<vmem>>, vector<64x64xf32>
    %c256 = arith.constant 256 : index
    %c0_22 = arith.constant 0 : index
    %55 = vector.load %arg2[%c256, %c0_22] : memref<336x128xf32, #tpu.memory_space<vmem>>, vector<1x64xf32>
    %cst_23 = arith.constant dense<0.000000e+00> : vector<8x64xf32>
    %56 = tpu.matmul %53, %54, %cst_23 {dimension_numbers = #tpu.dot_dimension_numbers<[1], [0], [0], [1], [0, 0, 1, 1], [], []>} : vector<8x64xf32>, vector<64x64xf32>, vector<8x64xf32> -> vector<8x64xf32>
    %57 = vector.broadcast %55 : vector<1x64xf32> to vector<8x64xf32>
    %58 = arith.addf %56, %57 : vector<8x64xf32>
    %cst_24 = arith.constant 0.000000e+00 : f32
    %59 = vector.broadcast %cst_24 : f32 to vector<8x64xf32>
    %60 = arith.cmpf ogt, %58, %59 : vector<8x64xf32>
    %cst_25 = arith.constant 0.00999999977 : f32
    %61 = vector.broadcast %cst_25 : f32 to vector<8x64xf32>
    %62 = arith.mulf %61, %58 : vector<8x64xf32>
    %63 = arith.select %60, %58, %62 : vector<8x64xi1>, vector<8x64xf32>
    %c264 = arith.constant 264 : index
    %c0_26 = arith.constant 0 : index
    %64 = vector.load %arg2[%c264, %c0_26] : memref<336x128xf32, #tpu.memory_space<vmem>>, vector<64x128xf32>
    %c328 = arith.constant 328 : index
    %c0_27 = arith.constant 0 : index
    %65 = vector.load %arg2[%c328, %c0_27] : memref<336x128xf32, #tpu.memory_space<vmem>>, vector<1x128xf32>
    %cst_28 = arith.constant dense<0.000000e+00> : vector<8x128xf32>
    %66 = tpu.matmul %63, %64, %cst_28 {dimension_numbers = #tpu.dot_dimension_numbers<[1], [0], [0], [1], [0, 0, 1, 1], [], []>} : vector<8x64xf32>, vector<64x128xf32>, vector<8x128xf32> -> vector<8x128xf32>
    %67 = vector.broadcast %65 : vector<1x128xf32> to vector<8x128xf32>
    %68 = arith.addf %66, %67 : vector<8x128xf32>
    %c0_29 = arith.constant 0 : index
    %c0_30 = arith.constant 0 : index
    %69 = vector.load %arg3[%c0_29, %c0_30] : memref<8x128xf32, #tpu.memory_space<vmem>>, vector<8x128xf32>
    tpu.vector_store %arg3[%c0_29, %c0_30], %68 {strides = array<i32>} : memref<8x128xf32, #tpu.memory_space<vmem>>, vector<8x128xf32>,
    return
  }
  func.func @transform_0(%arg0: i32) -> (i32, i32) {
    %c0_i32 = arith.constant 0 : i32
    %c0_i32_0 = arith.constant 0 : i32
    return %arg0, %c0_i32 : i32, i32
  }
  func.func @transform_1(%arg0: i32) -> (i32, i32) {
    %c0_i32 = arith.constant 0 : i32
    %c0_i32_0 = arith.constant 0 : i32
    %c0_i32_1 = arith.constant 0 : i32
    return %c0_i32, %c0_i32_0 : i32, i32
  }
  func.func @transform_2(%arg0: i32) -> (i32, i32) {
    %c0_i32 = arith.constant 0 : i32
    %c0_i32_0 = arith.constant 0 : i32
    return %arg0, %c0_i32 : i32, i32
  }
}

module attributes {stable_mosaic.version = 11 : i64} {
  func.func @anchor_selector_kernel(%arg0: i32, %arg1: memref<8x32xf32, #tpu.memory_space<vmem>>, %arg2: memref<336x128xf32, #tpu.memory_space<vmem>>, %arg3: memref<8x128xf32, #tpu.memory_space<vmem>>) attributes {dimension_semantics = [#tpu.dimension_semantics<parallel>], iteration_bounds = array<i64: 2>, scalar_prefetch = 0 : i64, scratch_operands = 0 : i64, tpu.core_type = #tpu.core_type<tc>, window_params = [{transform_indices = @transform_0, window_bounds = array<i64: 8, 32>}, {pipeline_mode = #tpu.pipeline_mode<synchronous>, transform_indices = @transform_1, window_bounds = array<i64: 336, 128>}, {transform_indices = @transform_2, window_bounds = array<i64: 8, 128>}]} {
    %c0 = arith.constant 0 : index
    %c0_0 = arith.constant 0 : index
    %0 = vector.load %arg1[%c0, %c0_0] : memref<8x32xf32, #tpu.memory_space<vmem>>, vector<8x32xf32>
    %1 = vector.shape_cast %0 : vector<8x32xf32> to vector<8x16x2xf32>
    %c2 = arith.constant 2 : index
    %c0_1 = arith.constant 0 : index
    %2 = vector.load %arg2[%c2, %c0_1] : memref<336x128xf32, #tpu.memory_space<vmem>>, vector<1x64xf32>
    %3 = vector.shape_cast %2 : vector<1x64xf32> to vector<1x1x64xf32>
    %c0_2 = arith.constant 0 : index
    %c0_3 = arith.constant 0 : index
    %4 = vector.load %arg2[%c0_2, %c0_3] : memref<336x128xf32, #tpu.memory_space<vmem>>, vector<1x64xf32>
    %5 = vector.shape_cast %4 : vector<1x64xf32> to vector<1x1x64xf32>
    %6 = vector.extract_strided_slice %1 {offsets = [0, 0, 0], sizes = [8, 16, 1], strides = [1, 1, 1]} : vector<8x16x2xf32> to vector<8x16x1xf32>
    %7 = vector.broadcast %6 : vector<8x16x1xf32> to vector<8x16x64xf32>
    %8 = vector.broadcast %5 : vector<1x1x64xf32> to vector<8x16x64xf32>
    %9 = arith.mulf %7, %8 : vector<8x16x64xf32>
    %10 = vector.broadcast %3 : vector<1x1x64xf32> to vector<8x16x64xf32>
    %11 = arith.addf %10, %9 : vector<8x16x64xf32>
    %c1 = arith.constant 1 : index
    %c0_4 = arith.constant 0 : index
    %12 = vector.load %arg2[%c1, %c0_4] : memref<336x128xf32, #tpu.memory_space<vmem>>, vector<1x64xf32>
    %13 = vector.shape_cast %12 : vector<1x64xf32> to vector<1x1x64xf32>
    %14 = vector.extract_strided_slice %1 {offsets = [0, 0, 1], sizes = [8, 16, 1], strides = [1, 1, 1]} : vector<8x16x2xf32> to vector<8x16x1xf32>
    %15 = vector.broadcast %14 : vector<8x16x1xf32> to vector<8x16x64xf32>
    %16 = vector.broadcast %13 : vector<1x1x64xf32> to vector<8x16x64xf32>
    %17 = arith.mulf %15, %16 : vector<8x16x64xf32>
    %18 = arith.addf %11, %17 : vector<8x16x64xf32>
    %cst = arith.constant 0.000000e+00 : f32
    %19 = vector.broadcast %cst : f32 to vector<8x16x64xf32>
    %20 = arith.cmpf ogt, %18, %19 : vector<8x16x64xf32>
    %cst_5 = arith.constant 0.00999999977 : f32
    %21 = vector.broadcast %cst_5 : f32 to vector<8x16x64xf32>
    %22 = arith.mulf %21, %18 : vector<8x16x64xf32>
    %23 = arith.select %20, %18, %22 : vector<8x16x64xi1>, vector<8x16x64xf32>
    %24 = vector.shape_cast %23 : vector<8x16x64xf32> to vector<128x64xf32>
    %c8 = arith.constant 8 : index
    %c0_6 = arith.constant 0 : index
    %25 = vector.load %arg2[%c8, %c0_6] : memref<336x128xf32, #tpu.memory_space<vmem>>, vector<64x64xf32>
    %c72 = arith.constant 72 : index
    %c0_7 = arith.constant 0 : index
    %26 = vector.load %arg2[%c72, %c0_7] : memref<336x128xf32, #tpu.memory_space<vmem>>, vector<1x64xf32>
    %cst_8 = arith.constant dense<0.000000e+00> : vector<128x64xf32>
    %27 = tpu.matmul %24, %25, %cst_8 {dimension_numbers = #tpu.dot_dimension_numbers<[1], [0], [0], [1], [0, 0, 1, 1], [], []>} : vector<128x64xf32>, vector<64x64xf32>, vector<128x64xf32> -> vector<128x64xf32>
    %28 = vector.broadcast %26 : vector<1x64xf32> to vector<128x64xf32>
    %29 = arith.addf %27, %28 : vector<128x64xf32>
    %cst_9 = arith.constant 0.000000e+00 : f32
    %30 = vector.broadcast %cst_9 : f32 to vector<128x64xf32>
    %31 = arith.cmpf ogt, %29, %30 : vector<128x64xf32>
    %cst_10 = arith.constant 0.00999999977 : f32
    %32 = vector.broadcast %cst_10 : f32 to vector<128x64xf32>
    %33 = arith.mulf %32, %29 : vector<128x64xf32>
    %34 = arith.select %31, %29, %33 : vector<128x64xi1>, vector<128x64xf32>
    %35 = vector.shape_cast %34 : vector<128x64xf32> to vector<8x16x64xf32>
    %cst_11 = arith.constant dense<0.000000e+00> : vector<8x64xf32>
    %36 = vector.multi_reduction <add>, %35, %cst_11 [1] : vector<8x16x64xf32> to vector<8x64xf32>
    %cst_12 = arith.constant 1.600000e+01 : f32
    %37 = vector.broadcast %cst_12 : f32 to vector<8x64xf32>
    %38 = arith.divf %36, %37 : vector<8x64xf32>
    %c80 = arith.constant 80 : index
    %c0_13 = arith.constant 0 : index
    %39 = vector.load %arg2[%c80, %c0_13] : memref<336x128xf32, #tpu.memory_space<vmem>>, vector<64x32xf32>
    %c144 = arith.constant 144 : index
    %c0_14 = arith.constant 0 : index
    %40 = vector.load %arg2[%c144, %c0_14] : memref<336x128xf32, #tpu.memory_space<vmem>>, vector<1x32xf32>
    %cst_15 = arith.constant dense<0.000000e+00> : vector<8x32xf32>
    %41 = tpu.matmul %38, %39, %cst_15 {dimension_numbers = #tpu.dot_dimension_numbers<[1], [0], [0], [1], [0, 0, 1, 1], [], []>} : vector<8x64xf32>, vector<64x32xf32>, vector<8x32xf32> -> vector<8x32xf32>
    %42 = vector.broadcast %40 : vector<1x32xf32> to vector<8x32xf32>
    %43 = arith.addf %41, %42 : vector<8x32xf32>
    %c152 = arith.constant 152 : index
    %c0_16 = arith.constant 0 : index
    %44 = vector.load %arg2[%c152, %c0_16] : memref<336x128xf32, #tpu.memory_space<vmem>>, vector<32x64xf32>
    %c184 = arith.constant 184 : index
    %c0_17 = arith.constant 0 : index
    %45 = vector.load %arg2[%c184, %c0_17] : memref<336x128xf32, #tpu.memory_space<vmem>>, vector<1x64xf32>
    %cst_18 = arith.constant dense<0.000000e+00> : vector<8x64xf32>
    %46 = tpu.matmul %43, %44, %cst_18 {dimension_numbers = #tpu.dot_dimension_numbers<[1], [0], [0], [1], [0, 0, 1, 1], [], []>} : vector<8x32xf32>, vector<32x64xf32>, vector<8x64xf32> -> vector<8x64xf32>
    %47 = vector.broadcast %45 : vector<1x64xf32> to vector<8x64xf32>
    %48 = arith.addf %46, %47 : vector<8x64xf32>
    %cst_19 = arith.constant 0.000000e+00 : f32
    %49 = vector.broadcast %cst_19 : f32 to vector<8x64xf32>
    %50 = arith.cmpf ogt, %48, %49 : vector<8x64xf32>
    %cst_20 = arith.constant 0.00999999977 : f32
    %51 = vector.broadcast %cst_20 : f32 to vector<8x64xf32>
    %52 = arith.mulf %51, %48 : vector<8x64xf32>
    %53 = arith.select %50, %48, %52 : vector<8x64xi1>, vector<8x64xf32>
    %c192 = arith.constant 192 : index
    %c0_21 = arith.constant 0 : index
    %54 = vector.load %arg2[%c192, %c0_21] : memref<336x128xf32, #tpu.memory_space<vmem>>, vector<64x64xf32>
    %c256 = arith.constant 256 : index
    %c0_22 = arith.constant 0 : index
    %55 = vector.load %arg2[%c256, %c0_22] : memref<336x128xf32, #tpu.memory_space<vmem>>, vector<1x64xf32>
    %cst_23 = arith.constant dense<0.000000e+00> : vector<8x64xf32>
    %56 = tpu.matmul %53, %54, %cst_23 {dimension_numbers = #tpu.dot_dimension_numbers<[1], [0], [0], [1], [0, 0, 1, 1], [], []>} : vector<8x64xf32>, vector<64x64xf32>, vector<8x64xf32> -> vector<8x64xf32>
    %57 = vector.broadcast %55 : vector<1x64xf32> to vector<8x64xf32>
    %58 = arith.addf %56, %57 : vector<8x64xf32>
    %cst_24 = arith.constant 0.000000e+00 : f32
    %59 = vector.broadcast %cst_24 : f32 to vector<8x64xf32>
    %60 = arith.cmpf ogt, %58, %59 : vector<8x64xf32>
    %cst_25 = arith.constant 0.00999999977 : f32
    %61 = vector.broadcast %cst_25 : f32 to vector<8x64xf32>
    %62 = arith.mulf %61, %58 : vector<8x64xf32>
    %63 = arith.select %60, %58, %62 : vector<8x64xi1>, vector<8x64xf32>
    %c264 = arith.constant 264 : index
    %c0_26 = arith.constant 0 : index
    %64 = vector.load %arg2[%c264, %c0_26] : memref<336x128xf32, #tpu.memory_space<vmem>>, vector<64x128xf32>
    %c328 = arith.constant 328 : index
    %c0_27 = arith.constant 0 : index
    %65 = vector.load %arg2[%c328, %c0_27] : memref<336x128xf32, #tpu.memory_space<vmem>>, vector<1x128xf32>
    %cst_28 = arith.constant dense<0.000000e+00> : vector<8x128xf32>
    %66 = tpu.matmul %63, %64, %cst_28 {dimension_numbers = #tpu.dot_dimension_numbers<[1], [0], [0], [1], [0, 0, 1, 1], [], []>} : vector<8x64xf32>, vector<64x128xf32>, vector<8x128xf32> -> vector<8x128xf32>
    %67 = vector.broadcast %65 : vector<1x128xf32> to vector<8x128xf32>
    %68 = arith.addf %66, %67 : vector<8x128xf32>
    %c0_29 = arith.constant 0 : index
    %c0_30 = arith.constant 0 : index
    %69 = vector.load %arg3[%c0_29, %c0_30] : memref<8x128xf32, #tpu.memory_space<vmem>>, vector<8x128xf32>
    tpu.vector_store %arg3[%c0_29, %c0_30], %68 {strides = array<i32>} : memref<8x128xf32, #tpu.memory_space<vmem>>, vector<8x128xf32>,
    return
  }
  func.func @transform_0(%arg0: i32) -> (i32, i32) {
    %c0_i32 = arith.constant 0 : i32
    %c0_i32_0 = arith.constant 0 : i32
    return %arg0, %c0_i32 : i32, i32
  }
  func.func @transform_1(%arg0: i32) -> (i32, i32) {
    %c0_i32 = arith.constant 0 : i32
    %c0_i32_0 = arith.constant 0 : i32
    %c0_i32_1 = arith.constant 0 : i32
    return %c0_i32, %c0_i32_0 : i32, i32
  }
  func.func @transform_2(%arg0: i32) -> (i32, i32) {
    %c0_i32 = arith.constant 0 : i32
    %c0_i32_0 = arith.constant 0 : i32
    return %arg0, %c0_i32 : i32, i32
  }
}

</mosaic_0001>

<llo_original>
// kernel: tpu_custom_call.1
$region0: #{tpu_custom_call.1}
  #allocation0 [shape = 'u32[]', space=smem, size = 0x4, offset = 0x4, fixed_abs, tag = 'smem constant byte address 0x4 - core index']
  #allocation1 [shape = 'u32[72,128]{1,0:T(1,128)}', space=vmem, size = 0x9000, scoped, tag = 'internal scratch']
  %s0 = inlined_call_operand.hbm [shape: f32[16,32], index: 0, kind: input, shape index: {}]
  %s1 = inlined_call_operand.hbm [shape: f32[336,128], index: 1, kind: input, shape index: {}]
  %s2 = inlined_call_operand.hbm [shape: f32[16,128], index: 2, kind: output, shape index: {}]
  %s3 = sld [smem:[#allocation0]]
  $region49: #{tpu_custom_call.1} parent=0
    _
  %s5 = ssub.s32 1, %s3
  %s6 = scalar_select 0, %s5, %s3
  $region1: #{tpu_custom_call.1} parent=0
    #allocation2 [shape = 'u8[8192]{0}', space=vmem, size = 0x2000, scoped, tag = 'input window, operand 0']
    #allocation3 [shape = 's32[2]{0}', space=sflag, size = 0x8, scoped, tag = 'scoped memory for tpu_custom_call.1']
    #allocation4 [shape = 's32[2]{0}', space=sflag, size = 0x8, scoped, tag = 'scoped memory for tpu_custom_call.1']
    #allocation5 [shape = 'u8[172032]{0}', space=vmem, size = 0x2a000, scoped, tag = 'input window, operand 1, single buffered']
    #allocation6 [shape = 's32[1]{0}', space=sflag, size = 0x4, scoped, tag = 'scoped memory for tpu_custom_call.1']
    #allocation7 [shape = 'u8[8192]{0}', space=vmem, size = 0x2000, scoped, tag = 'output window, operand 0']
    %7 = vsyncpa [#allocation3], 0
    %s8 = scalar_lea.sflag [#allocation3], 1
    %9 = vsyncpa %s8, 0
    %10 = vsyncpa [#allocation6], 0
    %11 = vsyncpa [#allocation4], 0
    %s12 = scalar_lea.sflag [#allocation4], 1
    %13 = vsyncpa %s12, 0
    loop: start=0, step=1, limit=4
    $region2: #{tpu_custom_call.1} parent=1 // loop_pre_header
      _
    $region3: #{tpu_custom_call.1} parent=1 // loop_header
      %s15 = sphi 0, %s19
      %p16 = scmp.ge.s32.totalorder %s15, 4
      %s25 = sphi 0, %s27
      %s28 = sphi 0, %s25
      %s29 = sphi 0, %s28
      %s45 = sphi 0, %s29
      %s49 = sphi 0, %s49
      %s51 = sphi 0, %s49
      %s52 = sphi 0, %s51
      %s66 = sphi 0, %s52
      %s72 = sphi 0, %s74
      %s75 = sphi 0, %s72
      %s76 = sphi 0, %s75
      %s92 = sphi 0, %s76
    $region4: #{tpu_custom_call.1} parent=1 // loop_header_branch
      %18 = sbr.rel (%p16) target = $region8
    $region5: #{tpu_custom_call.1} parent=1 // loop_body
      %s20 = ssub.s32 %s15, 1
      %s21 = ssub.s32 %s15, 2
      %s22 = sadd.s32 %s15, 1
      %s23 = ssub.s32 %s15, %s22
      %p24 = scmp.eq.s32.totalorder %s23, 0
      %s26 = sadd.s32 %s25, 1
      %s27 = scalar_select %p24, %s25, %s26
      %p30 = pneg %p24
      %p31 = scmp.eq.s32.totalorder %s15, 1
      %p32 = por %p30, %p31
      %p33 = scmp.ne.s32.totalorder %s25, %s28
      %p34 = scmp.eq.s32.totalorder %s15, 0
      %p35 = por %p33, %p34
      %p36 = scmp.ne.s32.totalorder %s25, %s28
      %p37 = scmp.eq.s32.totalorder %s20, 1
      %p38 = por %p36, %p37
      %p39 = scmp.ne.s32.totalorder %s28, %s29
      %p40 = scmp.eq.s32.totalorder %s20, 0
      %p41 = por %p39, %p40
      %p42 = scmp.ne.s32.totalorder %s28, %s29
      %p43 = scmp.eq.s32.totalorder %s21, 1
      %p44 = por %p42, %p43
      %p46 = scmp.ne.s32.totalorder %s29, %s45
      %p47 = scmp.eq.s32.totalorder %s21, 0
      %p48 = por %p46, %p47
      %s50 = sadd.s32 %s49, 1
      %p53 = scmp.eq.s32.totalorder %s15, 1
      %p54 = scmp.ne.s32.totalorder %s49, %s51
      %p55 = scmp.eq.s32.totalorder %s15, 0
      %p56 = por %p54, %p55
      %p57 = scmp.ne.s32.totalorder %s49, %s51
      %p58 = scmp.eq.s32.totalorder %s20, 1
      %p59 = por %p57, %p58
      %p60 = scmp.ne.s32.totalorder %s51, %s52
      %p61 = scmp.eq.s32.totalorder %s20, 0
      %p62 = por %p60, %p61
      %p63 = scmp.ne.s32.totalorder %s51, %s52
      %p64 = scmp.eq.s32.totalorder %s21, 1
      %p65 = por %p63, %p64
      %p67 = scmp.ne.s32.totalorder %s52, %s66
      %p68 = scmp.eq.s32.totalorder %s21, 0
      %p69 = por %p67, %p68
      %s70 = ssub.s32 %s15, %s22
      %p71 = scmp.eq.s32.totalorder %s70, 0
      %s73 = sadd.s32 %s72, 1
      %s74 = scalar_select %p71, %s72, %s73
      %p77 = pneg %p71
      %p78 = scmp.eq.s32.totalorder %s15, 1
      %p79 = por %p77, %p78
      %p80 = scmp.ne.s32.totalorder %s72, %s75
      %p81 = scmp.eq.s32.totalorder %s15, 0
      %p82 = por %p80, %p81
      %p83 = scmp.ne.s32.totalorder %s72, %s75
      %p84 = scmp.eq.s32.totalorder %s20, 1
      %p85 = por %p83, %p84
      %p86 = scmp.ne.s32.totalorder %s75, %s76
      %p87 = scmp.eq.s32.totalorder %s20, 0
      %p88 = por %p86, %p87
      %p89 = scmp.ne.s32.totalorder %s75, %s76
      %p90 = scmp.eq.s32.totalorder %s21, 1
      %p91 = por %p89, %p90
      %p93 = scmp.ne.s32.totalorder %s76, %s92
      %p94 = scmp.eq.s32.totalorder %s21, 0
      %p95 = por %p93, %p94
      %p96 = scmp.le.s32.totalorder 1, %s15
      %p97 = scmp.lt.s32.totalorder %s15, 3
      %p98 = pnand %p96, %p97
      %p99 = pneg %p98
      // Predicated region
      $region9: #{tpu_custom_call.1} parent=5 // pred_check
        _
      $region10: #{tpu_custom_call.1} parent=5 // pred_check_branch
        %101 = sbr.rel (%p98) target = $region12
      $region11: #{tpu_custom_call.1} parent=5 // pred_region
        %s102 = ssub.s32 %s15, 1
        // Predicated region
        $region13: #{tpu_custom_call.1} parent=11 // pred_check
          %p103 = pneg %p62
        $region14: #{tpu_custom_call.1} parent=11 // pred_check_branch
          %105 = sbr.rel (%p103) target = $region16
        $region15: #{tpu_custom_call.1} parent=11 // pred_region
          %107 = vsyncadd [#allocation6], 0
          %s108 = sshll.u32 %s1, 4
          %s109 = int_to_ptr.hbm [resolvable:$true] %s108
          %s110 = sshll.u32 [#allocation5], 4
          %s111 = int_to_ptr.vmem [resolvable:$true] %s110
          %116 = dma.hbm_to_vmem [thread:$0]  %s109, 5376, %s111, [#allocation6], 128, 128, 8
        $region16: #{tpu_custom_call.1} parent=11 // pred_fallthru
          _
      $region12: #{tpu_custom_call.1} parent=5 // pred_fallthru
        _
      %p117 = scmp.lt.s32.totalorder %s15, 2
      // Predicated region
      $region17: #{tpu_custom_call.1} parent=5 // pred_check
        %p118 = pneg %p117
      $region18: #{tpu_custom_call.1} parent=5 // pred_check_branch
        %120 = sbr.rel (%p118) target = $region20
      $region19: #{tpu_custom_call.1} parent=5 // pred_region
        // Predicated region
        $region21: #{tpu_custom_call.1} parent=19 // pred_check
          %p121 = pneg %p35
        $region22: #{tpu_custom_call.1} parent=19 // pred_check_branch
          %123 = sbr.rel (%p121) target = $region24
        $region23: #{tpu_custom_call.1} parent=19 // pred_region
          %s124 = sand.u32 %s25, 1
          %s125 = scalar_lea.sflag [#allocation3], %s124
          %s126 = sand.u32 %s25, 1
          %s127 = smul.addr %s126, 8
          %s128 = scalar_lea.vmem [#allocation2], %s127
          %130 = vsyncadd %s125, 0
          %s131 = smul.addr %s15, 8
          %s132 = scalar_lea.hbm %s0, %s131
          %s134 = sshll.u32 %s132, 4
          %s135 = int_to_ptr.hbm [resolvable:$true] %s134
          %s136 = sshll.u32 %s128, 4
          %s137 = int_to_ptr.vmem [resolvable:$true] %s136
          %139 = dma.hbm_to_vmem [thread:$0]  %s135, 128, %s137, %s125
        $region24: #{tpu_custom_call.1} parent=19 // pred_fallthru
          _
      $region20: #{tpu_custom_call.1} parent=5 // pred_fallthru
        _
      %p140 = scmp.le.s32.totalorder 1, %s15
      %p141 = scmp.lt.s32.totalorder %s15, 3
      %p142 = pnand %p140, %p141
      %p143 = pneg %p142
      // Predicated region
      $region25: #{tpu_custom_call.1} parent=5 // pred_check
        _
      $region26: #{tpu_custom_call.1} parent=5 // pred_check_branch
        %145 = sbr.rel (%p142) target = $region28
      $region27: #{tpu_custom_call.1} parent=5 // pred_region
        %s146 = ssub.s32 %s15, 1
        %s147 = sand.u32 %s28, 1
        %s148 = scalar_lea.sflag [#allocation3], %s147
        %s149 = sand.u32 %s28, 1
        %s150 = smul.addr %s149, 8
        %s151 = scalar_lea.vmem [#allocation2], %s150
        // Predicated region
        $region29: #{tpu_custom_call.1} parent=27 // pred_check
          %p152 = pneg %p41
        $region30: #{tpu_custom_call.1} parent=27 // pred_check_branch
          %154 = sbr.rel (%p152) target = $region32
        $region31: #{tpu_custom_call.1} parent=27 // pred_region
          %156 = dma.done %s148, 128
        $region32: #{tpu_custom_call.1} parent=27 // pred_fallthru
          _
        // Predicated region
        $region33: #{tpu_custom_call.1} parent=27 // pred_check
          %p157 = pneg %p62
        $region34: #{tpu_custom_call.1} parent=27 // pred_check_branch
          %159 = sbr.rel (%p157) target = $region36
        $region35: #{tpu_custom_call.1} parent=27 // pred_region
          %161 = dma.done [#allocation6], 5376
        $region36: #{tpu_custom_call.1} parent=27 // pred_fallthru
          _
        %s162 = sand.u32 %s28, 1
        %s163 = scalar_lea.sflag [#allocation3], %s162
        %s164 = sand.u32 %s28, 1
        %s165 = smul.addr %s164, 8
        %s166 = scalar_lea.vmem [#allocation2], %s165
        %p167 = pneg %p41
        %p168 = pneg %p38
        %p169 = pneg %p62
        %p170 = pneg %p59
        %p171 = pneg %p88
        %p172 = pneg %p85
        %s173 = sand.u32 %s75, 1
        %s174 = scalar_lea.sflag [#allocation4], %s173
        %s175 = sand.u32 %s75, 1
        %s176 = smul.addr %s175, 8
        %s177 = scalar_lea.vmem [#allocation7], %s176
        %v178 = vld [vmem:[%s151] sm:$0xff]
        %180 = vrot.lane.b32.xlu0 %v178, 126
        %v181 = vpop.permute.xlu0 %180
        %183 = vrot.lane.b32.xlu0 %v178, 124
        %v184 = vpop.permute.xlu0 %183
        %186 = vrot.lane.b32.xlu0 %v178, 122
        %v187 = vpop.permute.xlu0 %186
        %189 = vrot.lane.b32.xlu0 %v178, 120
        %v190 = vpop.permute.xlu0 %189
        %192 = vrot.lane.b32.xlu0 %v178, 118
        %v193 = vpop.permute.xlu0 %192
        %195 = vrot.lane.b32.xlu0 %v178, 116
        %v196 = vpop.permute.xlu0 %195
        %198 = vrot.lane.b32.xlu0 %v178, 114
        %v199 = vpop.permute.xlu0 %198
        %201 = vrot.lane.b32.xlu0 %v178, 112
        %v202 = vpop.permute.xlu0 %201
        %204 = vrot.lane.b32.xlu0 %v178, 110
        %v205 = vpop.permute.xlu0 %204
        %207 = vrot.lane.b32.xlu0 %v178, 108
        %v208 = vpop.permute.xlu0 %207
        %210 = vrot.lane.b32.xlu0 %v178, 106
        %v211 = vpop.permute.xlu0 %210
        %213 = vrot.lane.b32.xlu0 %v178, 104
        %v214 = vpop.permute.xlu0 %213
        %216 = vrot.lane.b32.xlu0 %v178, 102
        %v217 = vpop.permute.xlu0 %216
        %219 = vrot.lane.b32.xlu0 %v178, 100
        %v220 = vpop.permute.xlu0 %219
        %222 = vrot.lane.b32.xlu0 %v178, 98
        %v223 = vpop.permute.xlu0 %222
        %v225 = vrot.slane %v184, 4
        %vm226 = vcmask 1047556
        %v227 = vsel %vm226, %v225, %v178
        %v228 = vrot.slane %v178, 4
        %v229 = vsel %vm226, %v184, %v228
        %v231 = vunpack.c.l.s4 1983009808
        %v232 = vunpack.c.0.s8 %v231
        %v233 = vperm.slane %v227, %v232
        %v235 = vunpack.c.l.s4 1983009808
        %v236 = vunpack.c.0.s8 %v235
        %v237 = vperm.slane %v229, %v236
        %v238 = vrot.slane %v187, 4
        %v239 = vsel %vm226, %v238, %v181
        %v240 = vrot.slane %v181, 4
        %v241 = vsel %vm226, %v187, %v240
        %v243 = vunpack.c.l.s4 1983009808
        %v244 = vunpack.c.0.s8 %v243
        %v245 = vperm.slane %v239, %v244
        %v247 = vunpack.c.l.s4 1983009808
        %v248 = vunpack.c.0.s8 %v247
        %v249 = vperm.slane %v241, %v248
        %v250 = vrot.slane %v196, 4
        %v251 = vsel %vm226, %v250, %v190
        %v252 = vrot.slane %v190, 4
        %v253 = vsel %vm226, %v196, %v252
        %v255 = vunpack.c.l.s4 1983009808
        %v256 = vunpack.c.0.s8 %v255
        %v257 = vperm.slane %v251, %v256
        %v259 = vunpack.c.l.s4 1983009808
        %v260 = vunpack.c.0.s8 %v259
        %v261 = vperm.slane %v253, %v260
        %v262 = vrot.slane %v199, 4
        %v263 = vsel %vm226, %v262, %v193
        %v264 = vrot.slane %v193, 4
        %v265 = vsel %vm226, %v199, %v264
        %v267 = vunpack.c.l.s4 1983009808
        %v268 = vunpack.c.0.s8 %v267
        %v269 = vperm.slane %v263, %v268
        %v271 = vunpack.c.l.s4 1983009808
        %v272 = vunpack.c.0.s8 %v271
        %v273 = vperm.slane %v265, %v272
        %v274 = vrot.slane %v245, 4
        %v275 = vsel %vm226, %v274, %v233
        %v276 = vrot.slane %v233, 4
        %v277 = vsel %vm226, %v245, %v276
        %v279 = vunpack.c.l.s4 1934713408
        %v280 = vunpack.c.0.s8 %v279
        %v281 = vperm.slane %v275, %v280
        %v283 = vunpack.c.l.s4 1934713408
        %v284 = vunpack.c.0.s8 %v283
        %v285 = vperm.slane %v277, %v284
        %v286 = vrot.slane %v249, 4
        %v287 = vsel %vm226, %v286, %v237
        %v288 = vrot.slane %v237, 4
        %v289 = vsel %vm226, %v249, %v288
        %v291 = vunpack.c.l.s4 1934713408
        %v292 = vunpack.c.0.s8 %v291
        %v293 = vperm.slane %v287, %v292
        %v295 = vunpack.c.l.s4 1934713408
        %v296 = vunpack.c.0.s8 %v295
        %v297 = vperm.slane %v289, %v296
        %v298 = vrot.slane %v269, 4
        %v299 = vsel %vm226, %v298, %v257
        %v300 = vrot.slane %v257, 4
        %v301 = vsel %vm226, %v269, %v300
        %v303 = vunpack.c.l.s4 1934713408
        %v304 = vunpack.c.0.s8 %v303
        %v305 = vperm.slane %v299, %v304
        %v307 = vunpack.c.l.s4 1934713408
        %v308 = vunpack.c.0.s8 %v307
        %v309 = vperm.slane %v301, %v308
        %v310 = vrot.slane %v273, 4
        %v311 = vsel %vm226, %v310, %v261
        %v312 = vrot.slane %v261, 4
        %v313 = vsel %vm226, %v273, %v312
        %v315 = vunpack.c.l.s4 1934713408
        %v316 = vunpack.c.0.s8 %v315
        %v317 = vperm.slane %v311, %v316
        %v319 = vunpack.c.l.s4 1934713408
        %v320 = vunpack.c.0.s8 %v319
        %v321 = vperm.slane %v313, %v320
        %v322 = vrot.slane %v305, 4
        %v323 = vsel %vm226, %v322, %v281
        %v324 = vrot.slane %v281, 4
        %v325 = vsel %vm226, %v305, %v324
        %v326 = vrot.slane %v309, 4
        %v327 = vsel %vm226, %v326, %v285
        %v328 = vrot.slane %v285, 4
        %v329 = vsel %vm226, %v309, %v328
        %v330 = vrot.slane %v317, 4
        %v331 = vsel %vm226, %v330, %v293
        %v332 = vrot.slane %v293, 4
        %v333 = vsel %vm226, %v317, %v332
        %v334 = vrot.slane %v321, 4
        %v335 = vsel %vm226, %v334, %v297
        %v336 = vrot.slane %v297, 4
        %v337 = vsel %vm226, %v321, %v336
        %v338 = vrot.slane %v208, 4
        %v339 = vsel %vm226, %v338, %v202
        %v340 = vrot.slane %v202, 4
        %v341 = vsel %vm226, %v208, %v340
        %v343 = vunpack.c.l.s4 1983009808
        %v344 = vunpack.c.0.s8 %v343
        %v345 = vperm.slane %v339, %v344
        %v347 = vunpack.c.l.s4 1983009808
        %v348 = vunpack.c.0.s8 %v347
        %v349 = vperm.slane %v341, %v348
        %v350 = vrot.slane %v211, 4
        %v351 = vsel %vm226, %v350, %v205
        %v352 = vrot.slane %v205, 4
        %v353 = vsel %vm226, %v211, %v352
        %v355 = vunpack.c.l.s4 1983009808
        %v356 = vunpack.c.0.s8 %v355
        %v357 = vperm.slane %v351, %v356
        %v359 = vunpack.c.l.s4 1983009808
        %v360 = vunpack.c.0.s8 %v359
        %v361 = vperm.slane %v353, %v360
        %v362 = vrot.slane %v220, 4
        %v363 = vsel %vm226, %v362, %v214
        %v364 = vrot.slane %v214, 4
        %v365 = vsel %vm226, %v220, %v364
        %v367 = vunpack.c.l.s4 1983009808
        %v368 = vunpack.c.0.s8 %v367
        %v369 = vperm.slane %v363, %v368
        %v371 = vunpack.c.l.s4 1983009808
        %v372 = vunpack.c.0.s8 %v371
        %v373 = vperm.slane %v365, %v372
        %v374 = vrot.slane %v223, 4
        %v375 = vsel %vm226, %v374, %v217
        %v376 = vrot.slane %v217, 4
        %v377 = vsel %vm226, %v223, %v376
        %v379 = vunpack.c.l.s4 1983009808
        %v380 = vunpack.c.0.s8 %v379
        %v381 = vperm.slane %v375, %v380
        %v383 = vunpack.c.l.s4 1983009808
        %v384 = vunpack.c.0.s8 %v383
        %v385 = vperm.slane %v377, %v384
        %v386 = vrot.slane %v357, 4
        %v387 = vsel %vm226, %v386, %v345
        %v388 = vrot.slane %v345, 4
        %v389 = vsel %vm226, %v357, %v388
        %v391 = vunpack.c.l.s4 1934713408
        %v392 = vunpack.c.0.s8 %v391
        %v393 = vperm.slane %v387, %v392
        %v395 = vunpack.c.l.s4 1934713408
        %v396 = vunpack.c.0.s8 %v395
        %v397 = vperm.slane %v389, %v396
        %v398 = vrot.slane %v361, 4
        %v399 = vsel %vm226, %v398, %v349
        %v400 = vrot.slane %v349, 4
        %v401 = vsel %vm226, %v361, %v400
        %v403 = vunpack.c.l.s4 1934713408
        %v404 = vunpack.c.0.s8 %v403
        %v405 = vperm.slane %v399, %v404
        %v407 = vunpack.c.l.s4 1934713408
        %v408 = vunpack.c.0.s8 %v407
        %v409 = vperm.slane %v401, %v408
        %v410 = vrot.slane %v381, 4
        %v411 = vsel %vm226, %v410, %v369
        %v412 = vrot.slane %v369, 4
        %v413 = vsel %vm226, %v381, %v412
        %v415 = vunpack.c.l.s4 1934713408
        %v416 = vunpack.c.0.s8 %v415
        %v417 = vperm.slane %v411, %v416
        %v419 = vunpack.c.l.s4 1934713408
        %v420 = vunpack.c.0.s8 %v419
        %v421 = vperm.slane %v413, %v420
        %v422 = vrot.slane %v385, 4
        %v423 = vsel %vm226, %v422, %v373
        %v424 = vrot.slane %v373, 4
        %v425 = vsel %vm226, %v385, %v424
        %v427 = vunpack.c.l.s4 1934713408
        %v428 = vunpack.c.0.s8 %v427
        %v429 = vperm.slane %v423, %v428
        %v431 = vunpack.c.l.s4 1934713408
        %v432 = vunpack.c.0.s8 %v431
        %v433 = vperm.slane %v425, %v432
        %v434 = vrot.slane %v417, 4
        %v435 = vsel %vm226, %v434, %v393
        %v436 = vrot.slane %v393, 4
        %v437 = vsel %vm226, %v417, %v436
        %v438 = vrot.slane %v421, 4
        %v439 = vsel %vm226, %v438, %v397
        %v440 = vrot.slane %v397, 4
        %v441 = vsel %vm226, %v421, %v440
        %v442 = vrot.slane %v429, 4
        %v443 = vsel %vm226, %v442, %v405
        %v444 = vrot.slane %v405, 4
        %v445 = vsel %vm226, %v429, %v444
        %v446 = vrot.slane %v433, 4
        %v447 = vsel %vm226, %v446, %v409
        %v448 = vrot.slane %v409, 4
        %v449 = vsel %vm226, %v433, %v448
        %v450 = vld [vmem:[#allocation5 + $0x2] sm:$0x1]
        %v451 = vld [vmem:[#allocation5] sm:$0x1]
        %453 = vset.pattern.permute.xlu0 0
        %454 = vperm.xlu0 %453, %v323
        %v455 = vpop.permute.xlu0 %454
        %458 = vset.pattern.permute.xlu0 0
        %459 = vperm.xlu0 %458, %v435
        %v460 = vpop.permute.xlu0 %459
        %463 = vset.pattern.permute.xlu0 0
        %464 = vperm.xlu0 %463, %v325
        %v465 = vpop.permute.xlu0 %464
        %468 = vset.pattern.permute.xlu0 0
        %469 = vperm.xlu0 %468, %v437
        %v470 = vpop.permute.xlu0 %469
        %473 = vset.pattern.permute.xlu0 0
        %474 = vperm.xlu0 %473, %v327
        %v475 = vpop.permute.xlu0 %474
        %478 = vset.pattern.permute.xlu0 0
        %479 = vperm.xlu0 %478, %v439
        %v480 = vpop.permute.xlu0 %479
        %483 = vset.pattern.permute.xlu0 0
        %484 = vperm.xlu0 %483, %v329
        %v485 = vpop.permute.xlu0 %484
        %488 = vset.pattern.permute.xlu0 0
        %489 = vperm.xlu0 %488, %v441
        %v490 = vpop.permute.xlu0 %489
        %493 = vset.pattern.permute.xlu0 0
        %494 = vperm.xlu0 %493, %v331
        %v495 = vpop.permute.xlu0 %494
        %498 = vset.pattern.permute.xlu0 0
        %499 = vperm.xlu0 %498, %v443
        %v500 = vpop.permute.xlu0 %499
        %503 = vset.pattern.permute.xlu0 0
        %504 = vperm.xlu0 %503, %v333
        %v505 = vpop.permute.xlu0 %504
        %508 = vset.pattern.permute.xlu0 0
        %509 = vperm.xlu0 %508, %v445
        %v510 = vpop.permute.xlu0 %509
        %513 = vset.pattern.permute.xlu0 0
        %514 = vperm.xlu0 %513, %v335
        %v515 = vpop.permute.xlu0 %514
        %518 = vset.pattern.permute.xlu0 0
        %519 = vperm.xlu0 %518, %v447
        %v520 = vpop.permute.xlu0 %519
        %523 = vset.pattern.permute.xlu0 0
        %524 = vperm.xlu0 %523, %v337
        %v525 = vpop.permute.xlu0 %524
        %528 = vset.pattern.permute.xlu0 0
        %529 = vperm.xlu0 %528, %v449
        %v530 = vpop.permute.xlu0 %529
        %v532 = vperm.slane %v451, 0
        %v533 = vmul.f32 %v455, %v532
        %v534 = vmul.f32 %v460, %v532
        %v535 = vmul.f32 %v465, %v532
        %v536 = vmul.f32 %v470, %v532
        %v537 = vmul.f32 %v475, %v532
        %v538 = vmul.f32 %v480, %v532
        %v539 = vmul.f32 %v485, %v532
        %v540 = vmul.f32 %v490, %v532
        %v541 = vmul.f32 %v495, %v532
        %v542 = vmul.f32 %v500, %v532
        %v543 = vmul.f32 %v505, %v532
        %v544 = vmul.f32 %v510, %v532
        %v545 = vmul.f32 %v515, %v532
        %v546 = vmul.f32 %v520, %v532
        %v547 = vmul.f32 %v525, %v532
        %v548 = vmul.f32 %v530, %v532
        %v549 = vperm.slane %v450, 0
        %v550 = vadd.f32 %v549, %v533
        %v551 = vadd.f32 %v549, %v534
        %v552 = vadd.f32 %v549, %v535
        %v553 = vadd.f32 %v549, %v536
        %v554 = vadd.f32 %v549, %v537
        %v555 = vadd.f32 %v549, %v538
        %v556 = vadd.f32 %v549, %v539
        %v557 = vadd.f32 %v549, %v540
        %v558 = vadd.f32 %v549, %v541
        %v559 = vadd.f32 %v549, %v542
        %v560 = vadd.f32 %v549, %v543
        %v561 = vadd.f32 %v549, %v544
        %v562 = vadd.f32 %v549, %v545
        %v563 = vadd.f32 %v549, %v546
        %v564 = vadd.f32 %v549, %v547
        %v565 = vadd.f32 %v549, %v548
        %v566 = vld [vmem:[#allocation5 + $0x1] sm:$0x1]
        %567 = vset.pattern.permute.xlu0 1
        %568 = vperm.xlu0 %567, %v323
        %v569 = vpop.permute.xlu0 %568
        %571 = vset.pattern.permute.xlu0 1
        %572 = vperm.xlu0 %571, %v435
        %v573 = vpop.permute.xlu0 %572
        %575 = vset.pattern.permute.xlu0 1
        %576 = vperm.xlu0 %575, %v325
        %v577 = vpop.permute.xlu0 %576
        %579 = vset.pattern.permute.xlu0 1
        %580 = vperm.xlu0 %579, %v437
        %v581 = vpop.permute.xlu0 %580
        %583 = vset.pattern.permute.xlu0 1
        %584 = vperm.xlu0 %583, %v327
        %v585 = vpop.permute.xlu0 %584
        %587 = vset.pattern.permute.xlu0 1
        %588 = vperm.xlu0 %587, %v439
        %v589 = vpop.permute.xlu0 %588
        %591 = vset.pattern.permute.xlu0 1
        %592 = vperm.xlu0 %591, %v329
        %v593 = vpop.permute.xlu0 %592
        %595 = vset.pattern.permute.xlu0 1
        %596 = vperm.xlu0 %595, %v441
        %v597 = vpop.permute.xlu0 %596
        %599 = vset.pattern.permute.xlu0 1
        %600 = vperm.xlu0 %599, %v331
        %v601 = vpop.permute.xlu0 %600
        %603 = vset.pattern.permute.xlu0 1
        %604 = vperm.xlu0 %603, %v443
        %v605 = vpop.permute.xlu0 %604
        %607 = vset.pattern.permute.xlu0 1
        %608 = vperm.xlu0 %607, %v333
        %v609 = vpop.permute.xlu0 %608
        %611 = vset.pattern.permute.xlu0 1
        %612 = vperm.xlu0 %611, %v445
        %v613 = vpop.permute.xlu0 %612
        %615 = vset.pattern.permute.xlu0 1
        %616 = vperm.xlu0 %615, %v335
        %v617 = vpop.permute.xlu0 %616
        %619 = vset.pattern.permute.xlu0 1
        %620 = vperm.xlu0 %619, %v447
        %v621 = vpop.permute.xlu0 %620
        %623 = vset.pattern.permute.xlu0 1
        %624 = vperm.xlu0 %623, %v337
        %v625 = vpop.permute.xlu0 %624
        %627 = vset.pattern.permute.xlu0 1
        %628 = vperm.xlu0 %627, %v449
        %v629 = vpop.permute.xlu0 %628
        %v631 = vperm.slane %v566, 0
        %v632 = vmul.f32 %v569, %v631
        %v633 = vmul.f32 %v573, %v631
        %v634 = vmul.f32 %v577, %v631
        %v635 = vmul.f32 %v581, %v631
        %v636 = vmul.f32 %v585, %v631
        %v637 = vmul.f32 %v589, %v631
        %v638 = vmul.f32 %v593, %v631
        %v639 = vmul.f32 %v597, %v631
        %v640 = vmul.f32 %v601, %v631
        %v641 = vmul.f32 %v605, %v631
        %v642 = vmul.f32 %v609, %v631
        %v643 = vmul.f32 %v613, %v631
        %v644 = vmul.f32 %v617, %v631
        %v645 = vmul.f32 %v621, %v631
        %v646 = vmul.f32 %v625, %v631
        %v647 = vmul.f32 %v629, %v631
        %v648 = vadd.f32 %v550, %v632
        %v649 = vadd.f32 %v551, %v633
        %v650 = vadd.f32 %v552, %v634
        %v651 = vadd.f32 %v553, %v635
        %v652 = vadd.f32 %v554, %v636
        %v653 = vadd.f32 %v555, %v637
        %v654 = vadd.f32 %v556, %v638
        %v655 = vadd.f32 %v557, %v639
        %v656 = vadd.f32 %v558, %v640
        %v657 = vadd.f32 %v559, %v641
        %v658 = vadd.f32 %v560, %v642
        %v659 = vadd.f32 %v561, %v643
        %v660 = vadd.f32 %v562, %v644
        %v661 = vadd.f32 %v563, %v645
        %v662 = vadd.f32 %v564, %v646
        %v663 = vadd.f32 %v565, %v647
        %vm664 = vcmp.gt.f32.partialorder %v648, 0.0
        %vm665 = vcmp.gt.f32.partialorder %v649, 0.0
        %vm666 = vcmp.gt.f32.partialorder %v650, 0.0
        %vm667 = vcmp.gt.f32.partialorder %v651, 0.0
        %vm668 = vcmp.gt.f32.partialorder %v652, 0.0
        %vm669 = vcmp.gt.f32.partialorder %v653, 0.0
        %vm670 = vcmp.gt.f32.partialorder %v654, 0.0
        %vm671 = vcmp.gt.f32.partialorder %v655, 0.0
        %vm672 = vcmp.gt.f32.partialorder %v656, 0.0
        %vm673 = vcmp.gt.f32.partialorder %v657, 0.0
        %vm674 = vcmp.gt.f32.partialorder %v658, 0.0
        %vm675 = vcmp.gt.f32.partialorder %v659, 0.0
        %vm676 = vcmp.gt.f32.partialorder %v660, 0.0
        %vm677 = vcmp.gt.f32.partialorder %v661, 0.0
        %vm678 = vcmp.gt.f32.partialorder %v662, 0.0
        %vm679 = vcmp.gt.f32.partialorder %v663, 0.0
        %v680 = vmul.f32 %v648, 0.01
        %v681 = vmul.f32 %v649, 0.01
        %v682 = vmul.f32 %v650, 0.01
        %v683 = vmul.f32 %v651, 0.01
        %v684 = vmul.f32 %v652, 0.01
        %v685 = vmul.f32 %v653, 0.01
        %v686 = vmul.f32 %v654, 0.01
        %v687 = vmul.f32 %v655, 0.01
        %v688 = vmul.f32 %v656, 0.01
        %v689 = vmul.f32 %v657, 0.01
        %v690 = vmul.f32 %v658, 0.01
        %v691 = vmul.f32 %v659, 0.01
        %v692 = vmul.f32 %v660, 0.01
        %v693 = vmul.f32 %v661, 0.01
        %v694 = vmul.f32 %v662, 0.01
        %v695 = vmul.f32 %v663, 0.01
        %v696 = vsel %vm664, %v648, %v680
        %v697 = vsel %vm665, %v649, %v681
        %v698 = vsel %vm666, %v650, %v682
        %v699 = vsel %vm667, %v651, %v683
        %v700 = vsel %vm668, %v652, %v684
        %v701 = vsel %vm669, %v653, %v685
        %v702 = vsel %vm670, %v654, %v686
        %v703 = vsel %vm671, %v655, %v687
        %v704 = vsel %vm672, %v656, %v688
        %v705 = vsel %vm673, %v657, %v689
        %v706 = vsel %vm674, %v658, %v690
        %v707 = vsel %vm675, %v659, %v691
        %v708 = vsel %vm676, %v660, %v692
        %v709 = vsel %vm677, %v661, %v693
        %v710 = vsel %vm678, %v662, %v694
        %v711 = vsel %vm679, %v663, %v695
        %v712 = vld [vmem:[#allocation5 + $0x8] sm:$0xff]
        %v713 = vld [vmem:[#allocation5 + $0x10] sm:$0xff]
        %v714 = vld [vmem:[#allocation5 + $0x18] sm:$0xff]
        %v715 = vld [vmem:[#allocation5 + $0x20] sm:$0xff]
        %v716 = vld [vmem:[#allocation5 + $0x28] sm:$0xff]
        %v717 = vld [vmem:[#allocation5 + $0x30] sm:$0xff]
        %v718 = vld [vmem:[#allocation5 + $0x38] sm:$0xff]
        %v719 = vld [vmem:[#allocation5 + $0x40] sm:$0xff]
        %v720 = vld [vmem:[#allocation5 + $0x48] sm:$0x1]
        %v721 = vperm.slane %v720, 0
        %vm722 = vcmask 523264
        %v724 = vsel %vm722, %v696, 0
        %v727 = vsel %vm722, %v697, 0
        %v730 = vsel %vm722, %v698, 0
        %v733 = vsel %vm722, %v699, 0
        %v736 = vsel %vm722, %v700, 0
        %v739 = vsel %vm722, %v701, 0
        %v742 = vsel %vm722, %v702, 0
        %v745 = vsel %vm722, %v703, 0
        %v748 = vsel %vm722, %v704, 0
        %v751 = vsel %vm722, %v705, 0
        %v754 = vsel %vm722, %v706, 0
        %v757 = vsel %vm722, %v707, 0
        %v760 = vsel %vm722, %v708, 0
        %v763 = vsel %vm722, %v709, 0
        %v766 = vsel %vm722, %v710, 0
        %v769 = vsel %vm722, %v711, 0
        %771 = vmatpush.msra.mxu0 0.0
        %772 = vmatpush.msra.mxu0 0.0
        %773 = vmatpush.msra.mxu0 0.0
        %774 = vmatpush.msra.mxu0 0.0
        %775 = vmatpush.msra.mxu0 0.0
        %776 = vmatpush.msra.mxu0 0.0
        %777 = vmatpush.msra.mxu0 0.0
        %778 = vmatpush.msra.mxu0 0.0
        %779 = vmatpush.msra.mxu0 %v719
        %780 = vmatpush.msra.mxu0 %v718
        %781 = vmatpush.msra.mxu0 %v717
        %782 = vmatpush.msra.mxu0 %v716
        %783 = vmatpush.msra.mxu0 %v715
        %784 = vmatpush.msra.mxu0 %v714
        %785 = vmatpush.msra.mxu0 %v713
        %786 = vmatpush.msra.mxu0 %v712
        %787 = vmatmul.f32.gmra.mxu0 %v724
        %v788 = vpop.f32.mrf.mxu0
        %v789 = vadd.f32 %v721, %v788
        %790 = vmatmul.f32.gmra.mxu0 %v727
        %v791 = vpop.f32.mrf.mxu0
        %v792 = vadd.f32 %v721, %v791
        %793 = vmatmul.f32.gmra.mxu0 %v730
        %v794 = vpop.f32.mrf.mxu0
        %v795 = vadd.f32 %v721, %v794
        %796 = vmatmul.f32.gmra.mxu0 %v733
        %v797 = vpop.f32.mrf.mxu0
        %v798 = vadd.f32 %v721, %v797
        %799 = vmatmul.f32.gmra.mxu0 %v736
        %v800 = vpop.f32.mrf.mxu0
        %v801 = vadd.f32 %v721, %v800
        %802 = vmatmul.f32.gmra.mxu0 %v739
        %v803 = vpop.f32.mrf.mxu0
        %v804 = vadd.f32 %v721, %v803
        %805 = vmatmul.f32.gmra.mxu0 %v742
        %v806 = vpop.f32.mrf.mxu0
        %v807 = vadd.f32 %v721, %v806
        %808 = vmatmul.f32.gmra.mxu0 %v745
        %v809 = vpop.f32.mrf.mxu0
        %v810 = vadd.f32 %v721, %v809
        %811 = vmatmul.f32.gmra.mxu0 %v748
        %v812 = vpop.f32.mrf.mxu0
        %v813 = vadd.f32 %v721, %v812
        %814 = vmatmul.f32.gmra.mxu0 %v751
        %v815 = vpop.f32.mrf.mxu0
        %v816 = vadd.f32 %v721, %v815
        %817 = vmatmul.f32.gmra.mxu0 %v754
        %v818 = vpop.f32.mrf.mxu0
        %v819 = vadd.f32 %v721, %v818
        %820 = vmatmul.f32.gmra.mxu0 %v757
        %v821 = vpop.f32.mrf.mxu0
        %v822 = vadd.f32 %v721, %v821
        %823 = vmatmul.f32.gmra.mxu0 %v760
        %v824 = vpop.f32.mrf.mxu0
        %v825 = vadd.f32 %v721, %v824
        %826 = vmatmul.f32.gmra.mxu0 %v763
        %v827 = vpop.f32.mrf.mxu0
        %v828 = vadd.f32 %v721, %v827
        %829 = vmatmul.f32.gmra.mxu0 %v766
        %v830 = vpop.f32.mrf.mxu0
        %v831 = vadd.f32 %v721, %v830
        %832 = vmatmul.f32.gmra.mxu0 %v769
        %v833 = vpop.f32.mrf.mxu0
        %v834 = vadd.f32 %v721, %v833
        %835 = vdwg.mxu0
        %vm836 = vcmp.gt.f32.partialorder %v789, 0.0
        %vm837 = vcmp.gt.f32.partialorder %v792, 0.0
        %vm838 = vcmp.gt.f32.partialorder %v795, 0.0
        %vm839 = vcmp.gt.f32.partialorder %v798, 0.0
        %vm840 = vcmp.gt.f32.partialorder %v801, 0.0
        %vm841 = vcmp.gt.f32.partialorder %v804, 0.0
        %vm842 = vcmp.gt.f32.partialorder %v807, 0.0
        %vm843 = vcmp.gt.f32.partialorder %v810, 0.0
        %vm844 = vcmp.gt.f32.partialorder %v813, 0.0
        %vm845 = vcmp.gt.f32.partialorder %v816, 0.0
        %vm846 = vcmp.gt.f32.partialorder %v819, 0.0
        %vm847 = vcmp.gt.f32.partialorder %v822, 0.0
        %vm848 = vcmp.gt.f32.partialorder %v825, 0.0
        %vm849 = vcmp.gt.f32.partialorder %v828, 0.0
        %vm850 = vcmp.gt.f32.partialorder %v831, 0.0
        %vm851 = vcmp.gt.f32.partialorder %v834, 0.0
        %v852 = vmul.f32 %v789, 0.01
        %v853 = vmul.f32 %v792, 0.01
        %v854 = vmul.f32 %v795, 0.01
        %v855 = vmul.f32 %v798, 0.01
        %v856 = vmul.f32 %v801, 0.01
        %v857 = vmul.f32 %v804, 0.01
        %v858 = vmul.f32 %v807, 0.01
        %v859 = vmul.f32 %v810, 0.01
        %v860 = vmul.f32 %v813, 0.01
        %v861 = vmul.f32 %v816, 0.01
        %v862 = vmul.f32 %v819, 0.01
        %v863 = vmul.f32 %v822, 0.01
        %v864 = vmul.f32 %v825, 0.01
        %v865 = vmul.f32 %v828, 0.01
        %v866 = vmul.f32 %v831, 0.01
        %v867 = vmul.f32 %v834, 0.01
        %v868 = vsel %vm836, %v789, %v852
        %v869 = vsel %vm837, %v792, %v853
        %v870 = vsel %vm838, %v795, %v854
        %v871 = vsel %vm839, %v798, %v855
        %v872 = vsel %vm840, %v801, %v856
        %v873 = vsel %vm841, %v804, %v857
        %v874 = vsel %vm842, %v807, %v858
        %v875 = vsel %vm843, %v810, %v859
        %v876 = vsel %vm844, %v813, %v860
        %v877 = vsel %vm845, %v816, %v861
        %v878 = vsel %vm846, %v819, %v862
        %v879 = vsel %vm847, %v822, %v863
        %v880 = vsel %vm848, %v825, %v864
        %v881 = vsel %vm849, %v828, %v865
        %v882 = vsel %vm850, %v831, %v866
        %v883 = vsel %vm851, %v834, %v867
        %v884 = vsel %vm722, %v868, 0.0
        %v885 = vsel %vm722, %v869, 0.0
        %v886 = vadd.f32 %v884, %v885
        %v887 = vrot.slane %v886, 4
        %v888 = vadd.f32 %v886, %v887
        %v889 = vrot.slane %v888, 2
        %v890 = vadd.f32 %v888, %v889
        %v891 = vrot.slane %v890, 1
        %v892 = vadd.f32 %v890, %v891
        %v893 = vsel %vm722, %v870, 0.0
        %v894 = vsel %vm722, %v871, 0.0
        %v895 = vadd.f32 %v893, %v894
        %v896 = vrot.slane %v895, 4
        %v897 = vadd.f32 %v895, %v896
        %v898 = vrot.slane %v897, 2
        %v899 = vadd.f32 %v897, %v898
        %v900 = vrot.slane %v899, 1
        %v901 = vadd.f32 %v899, %v900
        %v902 = vsel %vm722, %v872, 0.0
        %v903 = vsel %vm722, %v873, 0.0
        %v904 = vadd.f32 %v902, %v903
        %v905 = vrot.slane %v904, 4
        %v906 = vadd.f32 %v904, %v905
        %v907 = vrot.slane %v906, 2
        %v908 = vadd.f32 %v906, %v907
        %v909 = vrot.slane %v908, 1
        %v910 = vadd.f32 %v908, %v909
        %v911 = vsel %vm722, %v874, 0.0
        %v912 = vsel %vm722, %v875, 0.0
        %v913 = vadd.f32 %v911, %v912
        %v914 = vrot.slane %v913, 4
        %v915 = vadd.f32 %v913, %v914
        %v916 = vrot.slane %v915, 2
        %v917 = vadd.f32 %v915, %v916
        %v918 = vrot.slane %v917, 1
        %v919 = vadd.f32 %v917, %v918
        %v920 = vsel %vm722, %v876, 0.0
        %v921 = vsel %vm722, %v877, 0.0
        %v922 = vadd.f32 %v920, %v921
        %v923 = vrot.slane %v922, 4
        %v924 = vadd.f32 %v922, %v923
        %v925 = vrot.slane %v924, 2
        %v926 = vadd.f32 %v924, %v925
        %v927 = vrot.slane %v926, 1
        %v928 = vadd.f32 %v926, %v927
        %v929 = vsel %vm722, %v878, 0.0
        %v930 = vsel %vm722, %v879, 0.0
        %v931 = vadd.f32 %v929, %v930
        %v932 = vrot.slane %v931, 4
        %v933 = vadd.f32 %v931, %v932
        %v934 = vrot.slane %v933, 2
        %v935 = vadd.f32 %v933, %v934
        %v936 = vrot.slane %v935, 1
        %v937 = vadd.f32 %v935, %v936
        %v938 = vsel %vm722, %v880, 0.0
        %v939 = vsel %vm722, %v881, 0.0
        %v940 = vadd.f32 %v938, %v939
        %v941 = vrot.slane %v940, 4
        %v942 = vadd.f32 %v940, %v941
        %v943 = vrot.slane %v942, 2
        %v944 = vadd.f32 %v942, %v943
        %v945 = vrot.slane %v944, 1
        %v946 = vadd.f32 %v944, %v945
        %v947 = vsel %vm722, %v882, 0.0
        %v948 = vsel %vm722, %v883, 0.0
        %v949 = vadd.f32 %v947, %v948
        %v950 = vrot.slane %v949, 4
        %v951 = vadd.f32 %v949, %v950
        %v952 = vrot.slane %v951, 2
        %v953 = vadd.f32 %v951, %v952
        %v954 = vrot.slane %v953, 1
        %v955 = vadd.f32 %v953, %v954
        %v956 = vrcp.pop 16.0
        %v957 = vmul.f32 16.0, %v956
        %v958 = vsub.f32 1.0, %v957
        %v959 = vmul.f32 %v956, %v958
        %v960 = vadd.f32 %v956, %v959
        %vm961 = vweird.f32 %v956
        %v962 = vsel %vm961, %v956, %v960
        %v963 = vmul.f32 %v892, %v962
        %v964 = vmul.f32 %v901, %v962
        %v965 = vmul.f32 %v910, %v962
        %v966 = vmul.f32 %v919, %v962
        %v967 = vmul.f32 %v928, %v962
        %v968 = vmul.f32 %v937, %v962
        %v969 = vmul.f32 %v946, %v962
        %v970 = vmul.f32 %v955, %v962
        %v971 = vld [vmem:[#allocation5 + $0x50] sm:$0xff]
        %v972 = vld [vmem:[#allocation5 + $0x58] sm:$0xff]
        %v973 = vld [vmem:[#allocation5 + $0x60] sm:$0xff]
        %v974 = vld [vmem:[#allocation5 + $0x68] sm:$0xff]
        %v975 = vld [vmem:[#allocation5 + $0x70] sm:$0xff]
        %v976 = vld [vmem:[#allocation5 + $0x78] sm:$0xff]
        %v977 = vld [vmem:[#allocation5 + $0x80] sm:$0xff]
        %v978 = vld [vmem:[#allocation5 + $0x88] sm:$0xff]
        %v979 = vld [vmem:[#allocation5 + $0x90] sm:$0x1]
        %v980 = vperm.slane %v979, 0
        %vm989 = vcmask 1041409
        %v990 = vsel %vm989, %v964, %v963
        %vm991 = vcmask 1042434
        %v992 = vsel %vm991, %v965, %v990
        %vm993 = vcmask 1043459
        %v994 = vsel %vm993, %v966, %v992
        %vm995 = vcmask 1044484
        %v996 = vsel %vm995, %v967, %v994
        %vm997 = vcmask 1045509
        %v998 = vsel %vm997, %v968, %v996
        %vm999 = vcmask 1046534
        %v1000 = vsel %vm999, %v969, %v998
        %vm1001 = vcmask 1047559
        %v1002 = vsel %vm1001, %v970, %v1000
        %v1003 = vsel %vm722, %v1002, 0
        %1005 = vmatpush.msra.mxu0 0.0
        %1006 = vmatpush.msra.mxu0 0.0
        %1007 = vmatpush.msra.mxu0 0.0
        %1008 = vmatpush.msra.mxu0 0.0
        %1009 = vmatpush.msra.mxu0 0.0
        %1010 = vmatpush.msra.mxu0 0.0
        %1011 = vmatpush.msra.mxu0 0.0
        %1012 = vmatpush.msra.mxu0 0.0
        %1013 = vmatpush.msra.mxu0 %v978
        %1014 = vmatpush.msra.mxu0 %v977
        %1015 = vmatpush.msra.mxu0 %v976
        %1016 = vmatpush.msra.mxu0 %v975
        %1017 = vmatpush.msra.mxu0 %v974
        %1018 = vmatpush.msra.mxu0 %v973
        %1019 = vmatpush.msra.mxu0 %v972
        %1020 = vmatpush.msra.mxu0 %v971
        %1021 = vmatmul.f32.gmra.mxu0 %v1003
        %v1022 = vpop.f32.mrf.mxu0
        %v1023 = vadd.f32 %v980, %v1022
        %1024 = vdwg.mxu0
        %v1025 = vld [vmem:[#allocation5 + $0x98] sm:$0xff]
        %v1026 = vld [vmem:[#allocation5 + $0xa0] sm:$0xff]
        %v1027 = vld [vmem:[#allocation5 + $0xa8] sm:$0xff]
        %v1028 = vld [vmem:[#allocation5 + $0xb0] sm:$0xff]
        %v1029 = vld [vmem:[#allocation5 + $0xb8] sm:$0x1]
        %v1030 = vperm.slane %v1029, 0
        %vm1031 = vcmask 261120
        %v1033 = vsel %vm1031, %v1023, 0
        %1035 = vmatpush.msra.mxu0 0.0
        %1036 = vmatpush.msra.mxu0 0.0
        %1037 = vmatpush.msra.mxu0 0.0
        %1038 = vmatpush.msra.mxu0 0.0
        %1039 = vmatpush.msra.mxu0 0.0
        %1040 = vmatpush.msra.mxu0 0.0
        %1041 = vmatpush.msra.mxu0 0.0
        %1042 = vmatpush.msra.mxu0 0.0
        %1043 = vmatpush.msra.mxu0 0.0
        %1044 = vmatpush.msra.mxu0 0.0
        %1045 = vmatpush.msra.mxu0 0.0
        %1046 = vmatpush.msra.mxu0 0.0
        %1047 = vmatpush.msra.mxu0 %v1028
        %1048 = vmatpush.msra.mxu0 %v1027
        %1049 = vmatpush.msra.mxu0 %v1026
        %1050 = vmatpush.msra.mxu0 %v1025
        %1051 = vmatmul.f32.gmra.mxu0 %v1033
        %v1052 = vpop.f32.mrf.mxu0
        %v1053 = vadd.f32 %v1030, %v1052
        %1054 = vdwg.mxu0
        %vm1055 = vcmp.gt.f32.partialorder %v1053, 0.0
        %v1056 = vmul.f32 %v1053, 0.01
        %v1057 = vsel %vm1055, %v1053, %v1056
        %v1058 = vld [vmem:[#allocation5 + $0xc0] sm:$0xff]
        %v1059 = vld [vmem:[#allocation5 + $0xc8] sm:$0xff]
        %v1060 = vld [vmem:[#allocation5 + $0xd0] sm:$0xff]
        %v1061 = vld [vmem:[#allocation5 + $0xd8] sm:$0xff]
        %v1062 = vld [vmem:[#allocation5 + $0xe0] sm:$0xff]
        %v1063 = vld [vmem:[#allocation5 + $0xe8] sm:$0xff]
        %v1064 = vld [vmem:[#allocation5 + $0xf0] sm:$0xff]
        %v1065 = vld [vmem:[#allocation5 + $0xf8] sm:$0xff]
        %v1066 = vld [vmem:[#allocation5 + $0x100] sm:$0x1]
        %v1067 = vperm.slane %v1066, 0
        %v1069 = vsel %vm722, %v1057, 0
        %1071 = vmatpush.msra.mxu0 0.0
        %1072 = vmatpush.msra.mxu0 0.0
        %1073 = vmatpush.msra.mxu0 0.0
        %1074 = vmatpush.msra.mxu0 0.0
        %1075 = vmatpush.msra.mxu0 0.0
        %1076 = vmatpush.msra.mxu0 0.0
        %1077 = vmatpush.msra.mxu0 0.0
        %1078 = vmatpush.msra.mxu0 0.0
        %1079 = vmatpush.msra.mxu0 %v1065
        %1080 = vmatpush.msra.mxu0 %v1064
        %1081 = vmatpush.msra.mxu0 %v1063
        %1082 = vmatpush.msra.mxu0 %v1062
        %1083 = vmatpush.msra.mxu0 %v1061
        %1084 = vmatpush.msra.mxu0 %v1060
        %1085 = vmatpush.msra.mxu0 %v1059
        %1086 = vmatpush.msra.mxu0 %v1058
        %1087 = vmatmul.f32.gmra.mxu0 %v1069
        %v1088 = vpop.f32.mrf.mxu0
        %v1089 = vadd.f32 %v1067, %v1088
        %1090 = vdwg.mxu0
        %vm1091 = vcmp.gt.f32.partialorder %v1089, 0.0
        %v1092 = vmul.f32 %v1089, 0.01
        %v1093 = vsel %vm1091, %v1089, %v1092
        %v1094 = vld [vmem:[#allocation5 + $0x108] sm:$0xff]
        %v1095 = vld [vmem:[#allocation5 + $0x110] sm:$0xff]
        %v1096 = vld [vmem:[#allocation5 + $0x118] sm:$0xff]
        %v1097 = vld [vmem:[#allocation5 + $0x120] sm:$0xff]
        %v1098 = vld [vmem:[#allocation5 + $0x128] sm:$0xff]
        %v1099 = vld [vmem:[#allocation5 + $0x130] sm:$0xff]
        %v1100 = vld [vmem:[#allocation5 + $0x138] sm:$0xff]
        %v1101 = vld [vmem:[#allocation5 + $0x140] sm:$0xff]
        %v1102 = vld [vmem:[#allocation5 + $0x148] sm:$0x1]
        %v1103 = vperm.slane %v1102, 0
        %v1105 = vsel %vm722, %v1093, 0
        %1107 = vmatpush.msra.mxu0 0.0
        %1108 = vmatpush.msra.mxu0 0.0
        %1109 = vmatpush.msra.mxu0 0.0
        %1110 = vmatpush.msra.mxu0 0.0
        %1111 = vmatpush.msra.mxu0 0.0
        %1112 = vmatpush.msra.mxu0 0.0
        %1113 = vmatpush.msra.mxu0 0.0
        %1114 = vmatpush.msra.mxu0 0.0
        %1115 = vmatpush.msra.mxu0 %v1101
        %1116 = vmatpush.msra.mxu0 %v1100
        %1117 = vmatpush.msra.mxu0 %v1099
        %1118 = vmatpush.msra.mxu0 %v1098
        %1119 = vmatpush.msra.mxu0 %v1097
        %1120 = vmatpush.msra.mxu0 %v1096
        %1121 = vmatpush.msra.mxu0 %v1095
        %1122 = vmatpush.msra.mxu0 %v1094
        %1123 = vmatmul.f32.gmra.mxu0 %v1105
        %v1124 = vpop.f32.mrf.mxu0
        %v1125 = vadd.f32 %v1103, %v1124
        %1126 = vdwg.mxu0
        %1127 = vst [vmem:[%s177] sm:$0xff] %v1125
        %s1128 = sand.u32 %s75, 1
        %s1129 = scalar_lea.sflag [#allocation4], %s1128
        %s1130 = sand.u32 %s75, 1
        %s1131 = smul.addr %s1130, 8
        %s1132 = scalar_lea.vmem [#allocation7], %s1131
        // Predicated region
        $region37: #{tpu_custom_call.1} parent=27 // pred_check
          %p1133 = pneg %p85
        $region38: #{tpu_custom_call.1} parent=27 // pred_check_branch
          %1135 = sbr.rel (%p1133) target = $region40
        $region39: #{tpu_custom_call.1} parent=27 // pred_region
          %1137 = vsyncadd %s1129, 0
          %s1138 = smul.addr %s20, 8
          %s1139 = scalar_lea.hbm %s2, %s1138
          %s1141 = sshll.u32 %s1132, 4
          %s1142 = int_to_ptr.vmem [resolvable:$true] %s1141
          %s1143 = sshll.u32 %s1139, 4
          %s1144 = int_to_ptr.hbm [resolvable:$true] %s1143
          %1146 = dma.vmem_to_hbm [thread:$0]  %s1142, 128, %s1144, %s1129
        $region40: #{tpu_custom_call.1} parent=27 // pred_fallthru
          _
      $region28: #{tpu_custom_call.1} parent=5 // pred_fallthru
        _
      %p1147 = scmp.le.s32.totalorder 2, %s15
      // Predicated region
      $region41: #{tpu_custom_call.1} parent=5 // pred_check
        %p1148 = pneg %p1147
      $region42: #{tpu_custom_call.1} parent=5 // pred_check_branch
        %1150 = sbr.rel (%p1148) target = $region44
      $region43: #{tpu_custom_call.1} parent=5 // pred_region
        %s1151 = ssub.s32 %s15, 2
        // Predicated region
        $region45: #{tpu_custom_call.1} parent=43 // pred_check
          %p1152 = pneg %p91
        $region46: #{tpu_custom_call.1} parent=43 // pred_check_branch
          %1154 = sbr.rel (%p1152) target = $region48
        $region47: #{tpu_custom_call.1} parent=43 // pred_region
          %s1155 = sand.u32 %s76, 1
          %s1156 = scalar_lea.sflag [#allocation4], %s1155
          %s1157 = sand.u32 %s76, 1
          %s1158 = smul.addr %s1157, 8
          %s1159 = scalar_lea.vmem [#allocation7], %s1158
          %1161 = dma.done %s1156, 128
        $region48: #{tpu_custom_call.1} parent=43 // pred_fallthru
          _
      $region44: #{tpu_custom_call.1} parent=5 // pred_fallthru
        _
    $region6: #{tpu_custom_call.1} parent=1 // loop_footer
      %s19 = sadd.s32 1, %s15
    $region7: #{tpu_custom_call.1} parent=1 // loop_footer_branch
      %14 = sbr.rel target = $region3
    $region8: #{tpu_custom_call.1} parent=1 // loop_exit
      _
    %1162 = vsyncpa [#allocation3], 1
    %s1163 = scalar_lea.sflag [#allocation3], 1
    %1164 = vsyncpa %s1163, 1
    %1165 = vsyncpa [#allocation6], 1
    %1166 = vsyncpa [#allocation4], 1
    %s1167 = scalar_lea.sflag [#allocation4], 1
    %1168 = vsyncpa %s1167, 1

// kernel: tpu_custom_call.1
$region0: #{tpu_custom_call.1}
  #allocation0 [shape = 'u32[]', space=smem, size = 0x4, offset = 0x4, fixed_abs, tag = 'smem constant byte address 0x4 - core index']
  #allocation1 [shape = 'u32[72,128]{1,0:T(1,128)}', space=vmem, size = 0x9000, scoped, tag = 'internal scratch']
  %s0 = inlined_call_operand.hbm [shape: f32[16,32], index: 0, kind: input, shape index: {}]
  %s1 = inlined_call_operand.hbm [shape: f32[336,128], index: 1, kind: input, shape index: {}]
  %s2 = inlined_call_operand.hbm [shape: f32[16,128], index: 2, kind: output, shape index: {}]
  %s3 = sld [smem:[#allocation0]]
  $region49: #{tpu_custom_call.1} parent=0
    _
  %s5 = ssub.s32 1, %s3
  %s6 = scalar_select 0, %s5, %s3
  $region1: #{tpu_custom_call.1} parent=0
    #allocation2 [shape = 'u8[8192]{0}', space=vmem, size = 0x2000, scoped, tag = 'input window, operand 0']
    #allocation3 [shape = 's32[2]{0}', space=sflag, size = 0x8, scoped, tag = 'scoped memory for tpu_custom_call.1']
    #allocation4 [shape = 's32[2]{0}', space=sflag, size = 0x8, scoped, tag = 'scoped memory for tpu_custom_call.1']
    #allocation5 [shape = 'u8[172032]{0}', space=vmem, size = 0x2a000, scoped, tag = 'input window, operand 1, single buffered']
    #allocation6 [shape = 's32[1]{0}', space=sflag, size = 0x4, scoped, tag = 'scoped memory for tpu_custom_call.1']
    #allocation7 [shape = 'u8[8192]{0}', space=vmem, size = 0x2000, scoped, tag = 'output window, operand 0']
    %7 = vsyncpa [#allocation3], 0
    %s8 = scalar_lea.sflag [#allocation3], 1
    %9 = vsyncpa %s8, 0
    %10 = vsyncpa [#allocation6], 0
    %11 = vsyncpa [#allocation4], 0
    %s12 = scalar_lea.sflag [#allocation4], 1
    %13 = vsyncpa %s12, 0
    loop: start=0, step=1, limit=4
    $region2: #{tpu_custom_call.1} parent=1 // loop_pre_header
      _
    $region3: #{tpu_custom_call.1} parent=1 // loop_header
      %s15 = sphi 0, %s19
      %p16 = scmp.ge.s32.totalorder %s15, 4
      %s25 = sphi 0, %s27
      %s28 = sphi 0, %s25
      %s29 = sphi 0, %s28
      %s45 = sphi 0, %s29
      %s49 = sphi 0, %s49
      %s51 = sphi 0, %s49
      %s52 = sphi 0, %s51
      %s66 = sphi 0, %s52
      %s72 = sphi 0, %s74
      %s75 = sphi 0, %s72
      %s76 = sphi 0, %s75
      %s92 = sphi 0, %s76
    $region4: #{tpu_custom_call.1} parent=1 // loop_header_branch
      %18 = sbr.rel (%p16) target = $region8
    $region5: #{tpu_custom_call.1} parent=1 // loop_body
      %s20 = ssub.s32 %s15, 1
      %s21 = ssub.s32 %s15, 2
      %s22 = sadd.s32 %s15, 1
      %s23 = ssub.s32 %s15, %s22
      %p24 = scmp.eq.s32.totalorder %s23, 0
      %s26 = sadd.s32 %s25, 1
      %s27 = scalar_select %p24, %s25, %s26
      %p30 = pneg %p24
      %p31 = scmp.eq.s32.totalorder %s15, 1
      %p32 = por %p30, %p31
      %p33 = scmp.ne.s32.totalorder %s25, %s28
      %p34 = scmp.eq.s32.totalorder %s15, 0
      %p35 = por %p33, %p34
      %p36 = scmp.ne.s32.totalorder %s25, %s28
      %p37 = scmp.eq.s32.totalorder %s20, 1
      %p38 = por %p36, %p37
      %p39 = scmp.ne.s32.totalorder %s28, %s29
      %p40 = scmp.eq.s32.totalorder %s20, 0
      %p41 = por %p39, %p40
      %p42 = scmp.ne.s32.totalorder %s28, %s29
      %p43 = scmp.eq.s32.totalorder %s21, 1
      %p44 = por %p42, %p43
      %p46 = scmp.ne.s32.totalorder %s29, %s45
      %p47 = scmp.eq.s32.totalorder %s21, 0
      %p48 = por %p46, %p47
      %s50 = sadd.s32 %s49, 1
      %p53 = scmp.eq.s32.totalorder %s15, 1
      %p54 = scmp.ne.s32.totalorder %s49, %s51
      %p55 = scmp.eq.s32.totalorder %s15, 0
      %p56 = por %p54, %p55
      %p57 = scmp.ne.s32.totalorder %s49, %s51
      %p58 = scmp.eq.s32.totalorder %s20, 1
      %p59 = por %p57, %p58
      %p60 = scmp.ne.s32.totalorder %s51, %s52
      %p61 = scmp.eq.s32.totalorder %s20, 0
      %p62 = por %p60, %p61
      %p63 = scmp.ne.s32.totalorder %s51, %s52
      %p64 = scmp.eq.s32.totalorder %s21, 1
      %p65 = por %p63, %p64
      %p67 = scmp.ne.s32.totalorder %s52, %s66
      %p68 = scmp.eq.s32.totalorder %s21, 0
      %p69 = por %p67, %p68
      %s70 = ssub.s32 %s15, %s22
      %p71 = scmp.eq.s32.totalorder %s70, 0
      %s73 = sadd.s32 %s72, 1
      %s74 = scalar_select %p71, %s72, %s73
      %p77 = pneg %p71
      %p78 = scmp.eq.s32.totalorder %s15, 1
      %p79 = por %p77, %p78
      %p80 = scmp.ne.s32.totalorder %s72, %s75
      %p81 = scmp.eq.s32.totalorder %s15, 0
      %p82 = por %p80, %p81
      %p83 = scmp.ne.s32.totalorder %s72, %s75
      %p84 = scmp.eq.s32.totalorder %s20, 1
      %p85 = por %p83, %p84
      %p86 = scmp.ne.s32.totalorder %s75, %s76
      %p87 = scmp.eq.s32.totalorder %s20, 0
      %p88 = por %p86, %p87
      %p89 = scmp.ne.s32.totalorder %s75, %s76
      %p90 = scmp.eq.s32.totalorder %s21, 1
      %p91 = por %p89, %p90
      %p93 = scmp.ne.s32.totalorder %s76, %s92
      %p94 = scmp.eq.s32.totalorder %s21, 0
      %p95 = por %p93, %p94
      %p96 = scmp.le.s32.totalorder 1, %s15
      %p97 = scmp.lt.s32.totalorder %s15, 3
      %p98 = pnand %p96, %p97
      %p99 = pneg %p98
      // Predicated region
      $region9: #{tpu_custom_call.1} parent=5 // pred_check
        _
      $region10: #{tpu_custom_call.1} parent=5 // pred_check_branch
        %101 = sbr.rel (%p98) target = $region12
      $region11: #{tpu_custom_call.1} parent=5 // pred_region
        %s102 = ssub.s32 %s15, 1
        // Predicated region
        $region13: #{tpu_custom_call.1} parent=11 // pred_check
          %p103 = pneg %p62
        $region14: #{tpu_custom_call.1} parent=11 // pred_check_branch
          %105 = sbr.rel (%p103) target = $region16
        $region15: #{tpu_custom_call.1} parent=11 // pred_region
          %107 = vsyncadd [#allocation6], 0
          %s108 = sshll.u32 %s1, 4
          %s109 = int_to_ptr.hbm [resolvable:$true] %s108
          %s110 = sshll.u32 [#allocation5], 4
          %s111 = int_to_ptr.vmem [resolvable:$true] %s110
          %116 = dma.hbm_to_vmem [thread:$0]  %s109, 5376, %s111, [#allocation6], 128, 128, 8
        $region16: #{tpu_custom_call.1} parent=11 // pred_fallthru
          _
      $region12: #{tpu_custom_call.1} parent=5 // pred_fallthru
        _
      %p117 = scmp.lt.s32.totalorder %s15, 2
      // Predicated region
      $region17: #{tpu_custom_call.1} parent=5 // pred_check
        %p118 = pneg %p117
      $region18: #{tpu_custom_call.1} parent=5 // pred_check_branch
        %120 = sbr.rel (%p118) target = $region20
      $region19: #{tpu_custom_call.1} parent=5 // pred_region
        // Predicated region
        $region21: #{tpu_custom_call.1} parent=19 // pred_check
          %p121 = pneg %p35
        $region22: #{tpu_custom_call.1} parent=19 // pred_check_branch
          %123 = sbr.rel (%p121) target = $region24
        $region23: #{tpu_custom_call.1} parent=19 // pred_region
          %s124 = sand.u32 %s25, 1
          %s125 = scalar_lea.sflag [#allocation3], %s124
          %s126 = sand.u32 %s25, 1
          %s127 = smul.addr %s126, 8
          %s128 = scalar_lea.vmem [#allocation2], %s127
          %130 = vsyncadd %s125, 0
          %s131 = smul.addr %s15, 8
          %s132 = scalar_lea.hbm %s0, %s131
          %s134 = sshll.u32 %s132, 4
          %s135 = int_to_ptr.hbm [resolvable:$true] %s134
          %s136 = sshll.u32 %s128, 4
          %s137 = int_to_ptr.vmem [resolvable:$true] %s136
          %139 = dma.hbm_to_vmem [thread:$0]  %s135, 128, %s137, %s125
        $region24: #{tpu_custom_call.1} parent=19 // pred_fallthru
          _
      $region20: #{tpu_custom_call.1} parent=5 // pred_fallthru
        _
      %p140 = scmp.le.s32.totalorder 1, %s15
      %p141 = scmp.lt.s32.totalorder %s15, 3
      %p142 = pnand %p140, %p141
      %p143 = pneg %p142
      // Predicated region
      $region25: #{tpu_custom_call.1} parent=5 // pred_check
        _
      $region26: #{tpu_custom_call.1} parent=5 // pred_check_branch
        %145 = sbr.rel (%p142) target = $region28
      $region27: #{tpu_custom_call.1} parent=5 // pred_region
        %s146 = ssub.s32 %s15, 1
        %s147 = sand.u32 %s28, 1
        %s148 = scalar_lea.sflag [#allocation3], %s147
        %s149 = sand.u32 %s28, 1
        %s150 = smul.addr %s149, 8
        %s151 = scalar_lea.vmem [#allocation2], %s150
        // Predicated region
        $region29: #{tpu_custom_call.1} parent=27 // pred_check
          %p152 = pneg %p41
        $region30: #{tpu_custom_call.1} parent=27 // pred_check_branch
          %154 = sbr.rel (%p152) target = $region32
        $region31: #{tpu_custom_call.1} parent=27 // pred_region
          %156 = dma.done %s148, 128
        $region32: #{tpu_custom_call.1} parent=27 // pred_fallthru
          _
        // Predicated region
        $region33: #{tpu_custom_call.1} parent=27 // pred_check
          %p157 = pneg %p62
        $region34: #{tpu_custom_call.1} parent=27 // pred_check_branch
          %159 = sbr.rel (%p157) target = $region36
        $region35: #{tpu_custom_call.1} parent=27 // pred_region
          %161 = dma.done [#allocation6], 5376
        $region36: #{tpu_custom_call.1} parent=27 // pred_fallthru
          _
        %s162 = sand.u32 %s28, 1
        %s163 = scalar_lea.sflag [#allocation3], %s162
        %s164 = sand.u32 %s28, 1
        %s165 = smul.addr %s164, 8
        %s166 = scalar_lea.vmem [#allocation2], %s165
        %p167 = pneg %p41
        %p168 = pneg %p38
        %p169 = pneg %p62
        %p170 = pneg %p59
        %p171 = pneg %p88
        %p172 = pneg %p85
        %s173 = sand.u32 %s75, 1
        %s174 = scalar_lea.sflag [#allocation4], %s173
        %s175 = sand.u32 %s75, 1
        %s176 = smul.addr %s175, 8
        %s177 = scalar_lea.vmem [#allocation7], %s176
        %v178 = vld [vmem:[%s151] sm:$0xff]
        %180 = vrot.lane.b32.xlu0 %v178, 126
        %v181 = vpop.permute.xlu0 %180
        %183 = vrot.lane.b32.xlu0 %v178, 124
        %v184 = vpop.permute.xlu0 %183
        %186 = vrot.lane.b32.xlu0 %v178, 122
        %v187 = vpop.permute.xlu0 %186
        %189 = vrot.lane.b32.xlu0 %v178, 120
        %v190 = vpop.permute.xlu0 %189
        %192 = vrot.lane.b32.xlu0 %v178, 118
        %v193 = vpop.permute.xlu0 %192
        %195 = vrot.lane.b32.xlu0 %v178, 116
        %v196 = vpop.permute.xlu0 %195
        %198 = vrot.lane.b32.xlu0 %v178, 114
        %v199 = vpop.permute.xlu0 %198
        %201 = vrot.lane.b32.xlu0 %v178, 112
        %v202 = vpop.permute.xlu0 %201
        %204 = vrot.lane.b32.xlu0 %v178, 110
        %v205 = vpop.permute.xlu0 %204
        %207 = vrot.lane.b32.xlu0 %v178, 108
        %v208 = vpop.permute.xlu0 %207
        %210 = vrot.lane.b32.xlu0 %v178, 106
        %v211 = vpop.permute.xlu0 %210
        %213 = vrot.lane.b32.xlu0 %v178, 104
        %v214 = vpop.permute.xlu0 %213
        %216 = vrot.lane.b32.xlu0 %v178, 102
        %v217 = vpop.permute.xlu0 %216
        %219 = vrot.lane.b32.xlu0 %v178, 100
        %v220 = vpop.permute.xlu0 %219
        %222 = vrot.lane.b32.xlu0 %v178, 98
        %v223 = vpop.permute.xlu0 %222
        %v225 = vrot.slane %v184, 4
        %vm226 = vcmask 1047556
        %v227 = vsel %vm226, %v225, %v178
        %v228 = vrot.slane %v178, 4
        %v229 = vsel %vm226, %v184, %v228
        %v231 = vunpack.c.l.s4 1983009808
        %v232 = vunpack.c.0.s8 %v231
        %v233 = vperm.slane %v227, %v232
        %v235 = vunpack.c.l.s4 1983009808
        %v236 = vunpack.c.0.s8 %v235
        %v237 = vperm.slane %v229, %v236
        %v238 = vrot.slane %v187, 4
        %v239 = vsel %vm226, %v238, %v181
        %v240 = vrot.slane %v181, 4
        %v241 = vsel %vm226, %v187, %v240
        %v243 = vunpack.c.l.s4 1983009808
        %v244 = vunpack.c.0.s8 %v243
        %v245 = vperm.slane %v239, %v244
        %v247 = vunpack.c.l.s4 1983009808
        %v248 = vunpack.c.0.s8 %v247
        %v249 = vperm.slane %v241, %v248
        %v250 = vrot.slane %v196, 4
        %v251 = vsel %vm226, %v250, %v190
        %v252 = vrot.slane %v190, 4
        %v253 = vsel %vm226, %v196, %v252
        %v255 = vunpack.c.l.s4 1983009808
        %v256 = vunpack.c.0.s8 %v255
        %v257 = vperm.slane %v251, %v256
        %v259 = vunpack.c.l.s4 1983009808
        %v260 = vunpack.c.0.s8 %v259
        %v261 = vperm.slane %v253, %v260
        %v262 = vrot.slane %v199, 4
        %v263 = vsel %vm226, %v262, %v193
        %v264 = vrot.slane %v193, 4
        %v265 = vsel %vm226, %v199, %v264
        %v267 = vunpack.c.l.s4 1983009808
        %v268 = vunpack.c.0.s8 %v267
        %v269 = vperm.slane %v263, %v268
        %v271 = vunpack.c.l.s4 1983009808
        %v272 = vunpack.c.0.s8 %v271
        %v273 = vperm.slane %v265, %v272
        %v274 = vrot.slane %v245, 4
        %v275 = vsel %vm226, %v274, %v233
        %v276 = vrot.slane %v233, 4
        %v277 = vsel %vm226, %v245, %v276
        %v279 = vunpack.c.l.s4 1934713408
        %v280 = vunpack.c.0.s8 %v279
        %v281 = vperm.slane %v275, %v280
        %v283 = vunpack.c.l.s4 1934713408
        %v284 = vunpack.c.0.s8 %v283
        %v285 = vperm.slane %v277, %v284
        %v286 = vrot.slane %v249, 4
        %v287 = vsel %vm226, %v286, %v237
        %v288 = vrot.slane %v237, 4
        %v289 = vsel %vm226, %v249, %v288
        %v291 = vunpack.c.l.s4 1934713408
        %v292 = vunpack.c.0.s8 %v291
        %v293 = vperm.slane %v287, %v292
        %v295 = vunpack.c.l.s4 1934713408
        %v296 = vunpack.c.0.s8 %v295
        %v297 = vperm.slane %v289, %v296
        %v298 = vrot.slane %v269, 4
        %v299 = vsel %vm226, %v298, %v257
        %v300 = vrot.slane %v257, 4
        %v301 = vsel %vm226, %v269, %v300
        %v303 = vunpack.c.l.s4 1934713408
        %v304 = vunpack.c.0.s8 %v303
        %v305 = vperm.slane %v299, %v304
        %v307 = vunpack.c.l.s4 1934713408
        %v308 = vunpack.c.0.s8 %v307
        %v309 = vperm.slane %v301, %v308
        %v310 = vrot.slane %v273, 4
        %v311 = vsel %vm226, %v310, %v261
        %v312 = vrot.slane %v261, 4
        %v313 = vsel %vm226, %v273, %v312
        %v315 = vunpack.c.l.s4 1934713408
        %v316 = vunpack.c.0.s8 %v315
        %v317 = vperm.slane %v311, %v316
        %v319 = vunpack.c.l.s4 1934713408
        %v320 = vunpack.c.0.s8 %v319
        %v321 = vperm.slane %v313, %v320
        %v322 = vrot.slane %v305, 4
        %v323 = vsel %vm226, %v322, %v281
        %v324 = vrot.slane %v281, 4
        %v325 = vsel %vm226, %v305, %v324
        %v326 = vrot.slane %v309, 4
        %v327 = vsel %vm226, %v326, %v285
        %v328 = vrot.slane %v285, 4
        %v329 = vsel %vm226, %v309, %v328
        %v330 = vrot.slane %v317, 4
        %v331 = vsel %vm226, %v330, %v293
        %v332 = vrot.slane %v293, 4
        %v333 = vsel %vm226, %v317, %v332
        %v334 = vrot.slane %v321, 4
        %v335 = vsel %vm226, %v334, %v297
        %v336 = vrot.slane %v297, 4
        %v337 = vsel %vm226, %v321, %v336
        %v338 = vrot.slane %v208, 4
        %v339 = vsel %vm226, %v338, %v202
        %v340 = vrot.slane %v202, 4
        %v341 = vsel %vm226, %v208, %v340
        %v343 = vunpack.c.l.s4 1983009808
        %v344 = vunpack.c.0.s8 %v343
        %v345 = vperm.slane %v339, %v344
        %v347 = vunpack.c.l.s4 1983009808
        %v348 = vunpack.c.0.s8 %v347
        %v349 = vperm.slane %v341, %v348
        %v350 = vrot.slane %v211, 4
        %v351 = vsel %vm226, %v350, %v205
        %v352 = vrot.slane %v205, 4
        %v353 = vsel %vm226, %v211, %v352
        %v355 = vunpack.c.l.s4 1983009808
        %v356 = vunpack.c.0.s8 %v355
        %v357 = vperm.slane %v351, %v356
        %v359 = vunpack.c.l.s4 1983009808
        %v360 = vunpack.c.0.s8 %v359
        %v361 = vperm.slane %v353, %v360
        %v362 = vrot.slane %v220, 4
        %v363 = vsel %vm226, %v362, %v214
        %v364 = vrot.slane %v214, 4
        %v365 = vsel %vm226, %v220, %v364
        %v367 = vunpack.c.l.s4 1983009808
        %v368 = vunpack.c.0.s8 %v367
        %v369 = vperm.slane %v363, %v368
        %v371 = vunpack.c.l.s4 1983009808
        %v372 = vunpack.c.0.s8 %v371
        %v373 = vperm.slane %v365, %v372
        %v374 = vrot.slane %v223, 4
        %v375 = vsel %vm226, %v374, %v217
        %v376 = vrot.slane %v217, 4
        %v377 = vsel %vm226, %v223, %v376
        %v379 = vunpack.c.l.s4 1983009808
        %v380 = vunpack.c.0.s8 %v379
        %v381 = vperm.slane %v375, %v380
        %v383 = vunpack.c.l.s4 1983009808
        %v384 = vunpack.c.0.s8 %v383
        %v385 = vperm.slane %v377, %v384
        %v386 = vrot.slane %v357, 4
        %v387 = vsel %vm226, %v386, %v345
        %v388 = vrot.slane %v345, 4
        %v389 = vsel %vm226, %v357, %v388
        %v391 = vunpack.c.l.s4 1934713408
        %v392 = vunpack.c.0.s8 %v391
        %v393 = vperm.slane %v387, %v392
        %v395 = vunpack.c.l.s4 1934713408
        %v396 = vunpack.c.0.s8 %v395
        %v397 = vperm.slane %v389, %v396
        %v398 = vrot.slane %v361, 4
        %v399 = vsel %vm226, %v398, %v349
        %v400 = vrot.slane %v349, 4
        %v401 = vsel %vm226, %v361, %v400
        %v403 = vunpack.c.l.s4 1934713408
        %v404 = vunpack.c.0.s8 %v403
        %v405 = vperm.slane %v399, %v404
        %v407 = vunpack.c.l.s4 1934713408
        %v408 = vunpack.c.0.s8 %v407
        %v409 = vperm.slane %v401, %v408
        %v410 = vrot.slane %v381, 4
        %v411 = vsel %vm226, %v410, %v369
        %v412 = vrot.slane %v369, 4
        %v413 = vsel %vm226, %v381, %v412
        %v415 = vunpack.c.l.s4 1934713408
        %v416 = vunpack.c.0.s8 %v415
        %v417 = vperm.slane %v411, %v416
        %v419 = vunpack.c.l.s4 1934713408
        %v420 = vunpack.c.0.s8 %v419
        %v421 = vperm.slane %v413, %v420
        %v422 = vrot.slane %v385, 4
        %v423 = vsel %vm226, %v422, %v373
        %v424 = vrot.slane %v373, 4
        %v425 = vsel %vm226, %v385, %v424
        %v427 = vunpack.c.l.s4 1934713408
        %v428 = vunpack.c.0.s8 %v427
        %v429 = vperm.slane %v423, %v428
        %v431 = vunpack.c.l.s4 1934713408
        %v432 = vunpack.c.0.s8 %v431
        %v433 = vperm.slane %v425, %v432
        %v434 = vrot.slane %v417, 4
        %v435 = vsel %vm226, %v434, %v393
        %v436 = vrot.slane %v393, 4
        %v437 = vsel %vm226, %v417, %v436
        %v438 = vrot.slane %v421, 4
        %v439 = vsel %vm226, %v438, %v397
        %v440 = vrot.slane %v397, 4
        %v441 = vsel %vm226, %v421, %v440
        %v442 = vrot.slane %v429, 4
        %v443 = vsel %vm226, %v442, %v405
        %v444 = vrot.slane %v405, 4
        %v445 = vsel %vm226, %v429, %v444
        %v446 = vrot.slane %v433, 4
        %v447 = vsel %vm226, %v446, %v409
        %v448 = vrot.slane %v409, 4
        %v449 = vsel %vm226, %v433, %v448
        %v450 = vld [vmem:[#allocation5 + $0x2] sm:$0x1]
        %v451 = vld [vmem:[#allocation5] sm:$0x1]
        %453 = vset.pattern.permute.xlu0 0
        %454 = vperm.xlu0 %453, %v323
        %v455 = vpop.permute.xlu0 %454
        %458 = vset.pattern.permute.xlu0 0
        %459 = vperm.xlu0 %458, %v435
        %v460 = vpop.permute.xlu0 %459
        %463 = vset.pattern.permute.xlu0 0
        %464 = vperm.xlu0 %463, %v325
        %v465 = vpop.permute.xlu0 %464
        %468 = vset.pattern.permute.xlu0 0
        %469 = vperm.xlu0 %468, %v437
        %v470 = vpop.permute.xlu0 %469
        %473 = vset.pattern.permute.xlu0 0
        %474 = vperm.xlu0 %473, %v327
        %v475 = vpop.permute.xlu0 %474
        %478 = vset.pattern.permute.xlu0 0
        %479 = vperm.xlu0 %478, %v439
        %v480 = vpop.permute.xlu0 %479
        %483 = vset.pattern.permute.xlu0 0
        %484 = vperm.xlu0 %483, %v329
        %v485 = vpop.permute.xlu0 %484
        %488 = vset.pattern.permute.xlu0 0
        %489 = vperm.xlu0 %488, %v441
        %v490 = vpop.permute.xlu0 %489
        %493 = vset.pattern.permute.xlu0 0
        %494 = vperm.xlu0 %493, %v331
        %v495 = vpop.permute.xlu0 %494
        %498 = vset.pattern.permute.xlu0 0
        %499 = vperm.xlu0 %498, %v443
        %v500 = vpop.permute.xlu0 %499
        %503 = vset.pattern.permute.xlu0 0
        %504 = vperm.xlu0 %503, %v333
        %v505 = vpop.permute.xlu0 %504
        %508 = vset.pattern.permute.xlu0 0
        %509 = vperm.xlu0 %508, %v445
        %v510 = vpop.permute.xlu0 %509
        %513 = vset.pattern.permute.xlu0 0
        %514 = vperm.xlu0 %513, %v335
        %v515 = vpop.permute.xlu0 %514
        %518 = vset.pattern.permute.xlu0 0
        %519 = vperm.xlu0 %518, %v447
        %v520 = vpop.permute.xlu0 %519
        %523 = vset.pattern.permute.xlu0 0
        %524 = vperm.xlu0 %523, %v337
        %v525 = vpop.permute.xlu0 %524
        %528 = vset.pattern.permute.xlu0 0
        %529 = vperm.xlu0 %528, %v449
        %v530 = vpop.permute.xlu0 %529
        %v532 = vperm.slane %v451, 0
        %v533 = vmul.f32 %v455, %v532
        %v534 = vmul.f32 %v460, %v532
        %v535 = vmul.f32 %v465, %v532
        %v536 = vmul.f32 %v470, %v532
        %v537 = vmul.f32 %v475, %v532
        %v538 = vmul.f32 %v480, %v532
        %v539 = vmul.f32 %v485, %v532
        %v540 = vmul.f32 %v490, %v532
        %v541 = vmul.f32 %v495, %v532
        %v542 = vmul.f32 %v500, %v532
        %v543 = vmul.f32 %v505, %v532
        %v544 = vmul.f32 %v510, %v532
        %v545 = vmul.f32 %v515, %v532
        %v546 = vmul.f32 %v520, %v532
        %v547 = vmul.f32 %v525, %v532
        %v548 = vmul.f32 %v530, %v532
        %v549 = vperm.slane %v450, 0
        %v550 = vadd.f32 %v549, %v533
        %v551 = vadd.f32 %v549, %v534
        %v552 = vadd.f32 %v549, %v535
        %v553 = vadd.f32 %v549, %v536
        %v554 = vadd.f32 %v549, %v537
        %v555 = vadd.f32 %v549, %v538
        %v556 = vadd.f32 %v549, %v539
        %v557 = vadd.f32 %v549, %v540
        %v558 = vadd.f32 %v549, %v541
        %v559 = vadd.f32 %v549, %v542
        %v560 = vadd.f32 %v549, %v543
        %v561 = vadd.f32 %v549, %v544
        %v562 = vadd.f32 %v549, %v545
        %v563 = vadd.f32 %v549, %v546
        %v564 = vadd.f32 %v549, %v547
        %v565 = vadd.f32 %v549, %v548
        %v566 = vld [vmem:[#allocation5 + $0x1] sm:$0x1]
        %567 = vset.pattern.permute.xlu0 1
        %568 = vperm.xlu0 %567, %v323
        %v569 = vpop.permute.xlu0 %568
        %571 = vset.pattern.permute.xlu0 1
        %572 = vperm.xlu0 %571, %v435
        %v573 = vpop.permute.xlu0 %572
        %575 = vset.pattern.permute.xlu0 1
        %576 = vperm.xlu0 %575, %v325
        %v577 = vpop.permute.xlu0 %576
        %579 = vset.pattern.permute.xlu0 1
        %580 = vperm.xlu0 %579, %v437
        %v581 = vpop.permute.xlu0 %580
        %583 = vset.pattern.permute.xlu0 1
        %584 = vperm.xlu0 %583, %v327
        %v585 = vpop.permute.xlu0 %584
        %587 = vset.pattern.permute.xlu0 1
        %588 = vperm.xlu0 %587, %v439
        %v589 = vpop.permute.xlu0 %588
        %591 = vset.pattern.permute.xlu0 1
        %592 = vperm.xlu0 %591, %v329
        %v593 = vpop.permute.xlu0 %592
        %595 = vset.pattern.permute.xlu0 1
        %596 = vperm.xlu0 %595, %v441
        %v597 = vpop.permute.xlu0 %596
        %599 = vset.pattern.permute.xlu0 1
        %600 = vperm.xlu0 %599, %v331
        %v601 = vpop.permute.xlu0 %600
        %603 = vset.pattern.permute.xlu0 1
        %604 = vperm.xlu0 %603, %v443
        %v605 = vpop.permute.xlu0 %604
        %607 = vset.pattern.permute.xlu0 1
        %608 = vperm.xlu0 %607, %v333
        %v609 = vpop.permute.xlu0 %608
        %611 = vset.pattern.permute.xlu0 1
        %612 = vperm.xlu0 %611, %v445
        %v613 = vpop.permute.xlu0 %612
        %615 = vset.pattern.permute.xlu0 1
        %616 = vperm.xlu0 %615, %v335
        %v617 = vpop.permute.xlu0 %616
        %619 = vset.pattern.permute.xlu0 1
        %620 = vperm.xlu0 %619, %v447
        %v621 = vpop.permute.xlu0 %620
        %623 = vset.pattern.permute.xlu0 1
        %624 = vperm.xlu0 %623, %v337
        %v625 = vpop.permute.xlu0 %624
        %627 = vset.pattern.permute.xlu0 1
        %628 = vperm.xlu0 %627, %v449
        %v629 = vpop.permute.xlu0 %628
        %v631 = vperm.slane %v566, 0
        %v632 = vmul.f32 %v569, %v631
        %v633 = vmul.f32 %v573, %v631
        %v634 = vmul.f32 %v577, %v631
        %v635 = vmul.f32 %v581, %v631
        %v636 = vmul.f32 %v585, %v631
        %v637 = vmul.f32 %v589, %v631
        %v638 = vmul.f32 %v593, %v631
        %v639 = vmul.f32 %v597, %v631
        %v640 = vmul.f32 %v601, %v631
        %v641 = vmul.f32 %v605, %v631
        %v642 = vmul.f32 %v609, %v631
        %v643 = vmul.f32 %v613, %v631
        %v644 = vmul.f32 %v617, %v631
        %v645 = vmul.f32 %v621, %v631
        %v646 = vmul.f32 %v625, %v631
        %v647 = vmul.f32 %v629, %v631
        %v648 = vadd.f32 %v550, %v632
        %v649 = vadd.f32 %v551, %v633
        %v650 = vadd.f32 %v552, %v634
        %v651 = vadd.f32 %v553, %v635
        %v652 = vadd.f32 %v554, %v636
        %v653 = vadd.f32 %v555, %v637
        %v654 = vadd.f32 %v556, %v638
        %v655 = vadd.f32 %v557, %v639
        %v656 = vadd.f32 %v558, %v640
        %v657 = vadd.f32 %v559, %v641
        %v658 = vadd.f32 %v560, %v642
        %v659 = vadd.f32 %v561, %v643
        %v660 = vadd.f32 %v562, %v644
        %v661 = vadd.f32 %v563, %v645
        %v662 = vadd.f32 %v564, %v646
        %v663 = vadd.f32 %v565, %v647
        %vm664 = vcmp.gt.f32.partialorder %v648, 0.0
        %vm665 = vcmp.gt.f32.partialorder %v649, 0.0
        %vm666 = vcmp.gt.f32.partialorder %v650, 0.0
        %vm667 = vcmp.gt.f32.partialorder %v651, 0.0
        %vm668 = vcmp.gt.f32.partialorder %v652, 0.0
        %vm669 = vcmp.gt.f32.partialorder %v653, 0.0
        %vm670 = vcmp.gt.f32.partialorder %v654, 0.0
        %vm671 = vcmp.gt.f32.partialorder %v655, 0.0
        %vm672 = vcmp.gt.f32.partialorder %v656, 0.0
        %vm673 = vcmp.gt.f32.partialorder %v657, 0.0
        %vm674 = vcmp.gt.f32.partialorder %v658, 0.0
        %vm675 = vcmp.gt.f32.partialorder %v659, 0.0
        %vm676 = vcmp.gt.f32.partialorder %v660, 0.0
        %vm677 = vcmp.gt.f32.partialorder %v661, 0.0
        %vm678 = vcmp.gt.f32.partialorder %v662, 0.0
        %vm679 = vcmp.gt.f32.partialorder %v663, 0.0
        %v680 = vmul.f32 %v648, 0.01
        %v681 = vmul.f32 %v649, 0.01
        %v682 = vmul.f32 %v650, 0.01
        %v683 = vmul.f32 %v651, 0.01
        %v684 = vmul.f32 %v652, 0.01
        %v685 = vmul.f32 %v653, 0.01
        %v686 = vmul.f32 %v654, 0.01
        %v687 = vmul.f32 %v655, 0.01
        %v688 = vmul.f32 %v656, 0.01
        %v689 = vmul.f32 %v657, 0.01
        %v690 = vmul.f32 %v658, 0.01
        %v691 = vmul.f32 %v659, 0.01
        %v692 = vmul.f32 %v660, 0.01
        %v693 = vmul.f32 %v661, 0.01
        %v694 = vmul.f32 %v662, 0.01
        %v695 = vmul.f32 %v663, 0.01
        %v696 = vsel %vm664, %v648, %v680
        %v697 = vsel %vm665, %v649, %v681
        %v698 = vsel %vm666, %v650, %v682
        %v699 = vsel %vm667, %v651, %v683
        %v700 = vsel %vm668, %v652, %v684
        %v701 = vsel %vm669, %v653, %v685
        %v702 = vsel %vm670, %v654, %v686
        %v703 = vsel %vm671, %v655, %v687
        %v704 = vsel %vm672, %v656, %v688
        %v705 = vsel %vm673, %v657, %v689
        %v706 = vsel %vm674, %v658, %v690
        %v707 = vsel %vm675, %v659, %v691
        %v708 = vsel %vm676, %v660, %v692
        %v709 = vsel %vm677, %v661, %v693
        %v710 = vsel %vm678, %v662, %v694
        %v711 = vsel %vm679, %v663, %v695
        %v712 = vld [vmem:[#allocation5 + $0x8] sm:$0xff]
        %v713 = vld [vmem:[#allocation5 + $0x10] sm:$0xff]
        %v714 = vld [vmem:[#allocation5 + $0x18] sm:$0xff]
        %v715 = vld [vmem:[#allocation5 + $0x20] sm:$0xff]
        %v716 = vld [vmem:[#allocation5 + $0x28] sm:$0xff]
        %v717 = vld [vmem:[#allocation5 + $0x30] sm:$0xff]
        %v718 = vld [vmem:[#allocation5 + $0x38] sm:$0xff]
        %v719 = vld [vmem:[#allocation5 + $0x40] sm:$0xff]
        %v720 = vld [vmem:[#allocation5 + $0x48] sm:$0x1]
        %v721 = vperm.slane %v720, 0
        %vm722 = vcmask 523264
        %v724 = vsel %vm722, %v696, 0
        %v727 = vsel %vm722, %v697, 0
        %v730 = vsel %vm722, %v698, 0
        %v733 = vsel %vm722, %v699, 0
        %v736 = vsel %vm722, %v700, 0
        %v739 = vsel %vm722, %v701, 0
        %v742 = vsel %vm722, %v702, 0
        %v745 = vsel %vm722, %v703, 0
        %v748 = vsel %vm722, %v704, 0
        %v751 = vsel %vm722, %v705, 0
        %v754 = vsel %vm722, %v706, 0
        %v757 = vsel %vm722, %v707, 0
        %v760 = vsel %vm722, %v708, 0
        %v763 = vsel %vm722, %v709, 0
        %v766 = vsel %vm722, %v710, 0
        %v769 = vsel %vm722, %v711, 0
        %771 = vmatpush.msra.mxu0 0.0
        %772 = vmatpush.msra.mxu0 0.0
        %773 = vmatpush.msra.mxu0 0.0
        %774 = vmatpush.msra.mxu0 0.0
        %775 = vmatpush.msra.mxu0 0.0
        %776 = vmatpush.msra.mxu0 0.0
        %777 = vmatpush.msra.mxu0 0.0
        %778 = vmatpush.msra.mxu0 0.0
        %779 = vmatpush.msra.mxu0 %v719
        %780 = vmatpush.msra.mxu0 %v718
        %781 = vmatpush.msra.mxu0 %v717
        %782 = vmatpush.msra.mxu0 %v716
        %783 = vmatpush.msra.mxu0 %v715
        %784 = vmatpush.msra.mxu0 %v714
        %785 = vmatpush.msra.mxu0 %v713
        %786 = vmatpush.msra.mxu0 %v712
        %787 = vmatmul.f32.gmra.mxu0 %v724
        %v788 = vpop.f32.mrf.mxu0
        %v789 = vadd.f32 %v721, %v788
        %790 = vmatmul.f32.gmra.mxu0 %v727
        %v791 = vpop.f32.mrf.mxu0
        %v792 = vadd.f32 %v721, %v791
        %793 = vmatmul.f32.gmra.mxu0 %v730
        %v794 = vpop.f32.mrf.mxu0
        %v795 = vadd.f32 %v721, %v794
        %796 = vmatmul.f32.gmra.mxu0 %v733
        %v797 = vpop.f32.mrf.mxu0
        %v798 = vadd.f32 %v721, %v797
        %799 = vmatmul.f32.gmra.mxu0 %v736
        %v800 = vpop.f32.mrf.mxu0
        %v801 = vadd.f32 %v721, %v800
        %802 = vmatmul.f32.gmra.mxu0 %v739
        %v803 = vpop.f32.mrf.mxu0
        %v804 = vadd.f32 %v721, %v803
        %805 = vmatmul.f32.gmra.mxu0 %v742
        %v806 = vpop.f32.mrf.mxu0
        %v807 = vadd.f32 %v721, %v806
        %808 = vmatmul.f32.gmra.mxu0 %v745
        %v809 = vpop.f32.mrf.mxu0
        %v810 = vadd.f32 %v721, %v809
        %811 = vmatmul.f32.gmra.mxu0 %v748
        %v812 = vpop.f32.mrf.mxu0
        %v813 = vadd.f32 %v721, %v812
        %814 = vmatmul.f32.gmra.mxu0 %v751
        %v815 = vpop.f32.mrf.mxu0
        %v816 = vadd.f32 %v721, %v815
        %817 = vmatmul.f32.gmra.mxu0 %v754
        %v818 = vpop.f32.mrf.mxu0
        %v819 = vadd.f32 %v721, %v818
        %820 = vmatmul.f32.gmra.mxu0 %v757
        %v821 = vpop.f32.mrf.mxu0
        %v822 = vadd.f32 %v721, %v821
        %823 = vmatmul.f32.gmra.mxu0 %v760
        %v824 = vpop.f32.mrf.mxu0
        %v825 = vadd.f32 %v721, %v824
        %826 = vmatmul.f32.gmra.mxu0 %v763
        %v827 = vpop.f32.mrf.mxu0
        %v828 = vadd.f32 %v721, %v827
        %829 = vmatmul.f32.gmra.mxu0 %v766
        %v830 = vpop.f32.mrf.mxu0
        %v831 = vadd.f32 %v721, %v830
        %832 = vmatmul.f32.gmra.mxu0 %v769
        %v833 = vpop.f32.mrf.mxu0
        %v834 = vadd.f32 %v721, %v833
        %835 = vdwg.mxu0
        %vm836 = vcmp.gt.f32.partialorder %v789, 0.0
        %vm837 = vcmp.gt.f32.partialorder %v792, 0.0
        %vm838 = vcmp.gt.f32.partialorder %v795, 0.0
        %vm839 = vcmp.gt.f32.partialorder %v798, 0.0
        %vm840 = vcmp.gt.f32.partialorder %v801, 0.0
        %vm841 = vcmp.gt.f32.partialorder %v804, 0.0
        %vm842 = vcmp.gt.f32.partialorder %v807, 0.0
        %vm843 = vcmp.gt.f32.partialorder %v810, 0.0
        %vm844 = vcmp.gt.f32.partialorder %v813, 0.0
        %vm845 = vcmp.gt.f32.partialorder %v816, 0.0
        %vm846 = vcmp.gt.f32.partialorder %v819, 0.0
        %vm847 = vcmp.gt.f32.partialorder %v822, 0.0
        %vm848 = vcmp.gt.f32.partialorder %v825, 0.0
        %vm849 = vcmp.gt.f32.partialorder %v828, 0.0
        %vm850 = vcmp.gt.f32.partialorder %v831, 0.0
        %vm851 = vcmp.gt.f32.partialorder %v834, 0.0
        %v852 = vmul.f32 %v789, 0.01
        %v853 = vmul.f32 %v792, 0.01
        %v854 = vmul.f32 %v795, 0.01
        %v855 = vmul.f32 %v798, 0.01
        %v856 = vmul.f32 %v801, 0.01
        %v857 = vmul.f32 %v804, 0.01
        %v858 = vmul.f32 %v807, 0.01
        %v859 = vmul.f32 %v810, 0.01
        %v860 = vmul.f32 %v813, 0.01
        %v861 = vmul.f32 %v816, 0.01
        %v862 = vmul.f32 %v819, 0.01
        %v863 = vmul.f32 %v822, 0.01
        %v864 = vmul.f32 %v825, 0.01
        %v865 = vmul.f32 %v828, 0.01
        %v866 = vmul.f32 %v831, 0.01
        %v867 = vmul.f32 %v834, 0.01
        %v868 = vsel %vm836, %v789, %v852
        %v869 = vsel %vm837, %v792, %v853
        %v870 = vsel %vm838, %v795, %v854
        %v871 = vsel %vm839, %v798, %v855
        %v872 = vsel %vm840, %v801, %v856
        %v873 = vsel %vm841, %v804, %v857
        %v874 = vsel %vm842, %v807, %v858
        %v875 = vsel %vm843, %v810, %v859
        %v876 = vsel %vm844, %v813, %v860
        %v877 = vsel %vm845, %v816, %v861
        %v878 = vsel %vm846, %v819, %v862
        %v879 = vsel %vm847, %v822, %v863
        %v880 = vsel %vm848, %v825, %v864
        %v881 = vsel %vm849, %v828, %v865
        %v882 = vsel %vm850, %v831, %v866
        %v883 = vsel %vm851, %v834, %v867
        %v884 = vsel %vm722, %v868, 0.0
        %v885 = vsel %vm722, %v869, 0.0
        %v886 = vadd.f32 %v884, %v885
        %v887 = vrot.slane %v886, 4
        %v888 = vadd.f32 %v886, %v887
        %v889 = vrot.slane %v888, 2
        %v890 = vadd.f32 %v888, %v889
        %v891 = vrot.slane %v890, 1
        %v892 = vadd.f32 %v890, %v891
        %v893 = vsel %vm722, %v870, 0.0
        %v894 = vsel %vm722, %v871, 0.0
        %v895 = vadd.f32 %v893, %v894
        %v896 = vrot.slane %v895, 4
        %v897 = vadd.f32 %v895, %v896
        %v898 = vrot.slane %v897, 2
        %v899 = vadd.f32 %v897, %v898
        %v900 = vrot.slane %v899, 1
        %v901 = vadd.f32 %v899, %v900
        %v902 = vsel %vm722, %v872, 0.0
        %v903 = vsel %vm722, %v873, 0.0
        %v904 = vadd.f32 %v902, %v903
        %v905 = vrot.slane %v904, 4
        %v906 = vadd.f32 %v904, %v905
        %v907 = vrot.slane %v906, 2
        %v908 = vadd.f32 %v906, %v907
        %v909 = vrot.slane %v908, 1
        %v910 = vadd.f32 %v908, %v909
        %v911 = vsel %vm722, %v874, 0.0
        %v912 = vsel %vm722, %v875, 0.0
        %v913 = vadd.f32 %v911, %v912
        %v914 = vrot.slane %v913, 4
        %v915 = vadd.f32 %v913, %v914
        %v916 = vrot.slane %v915, 2
        %v917 = vadd.f32 %v915, %v916
        %v918 = vrot.slane %v917, 1
        %v919 = vadd.f32 %v917, %v918
        %v920 = vsel %vm722, %v876, 0.0
        %v921 = vsel %vm722, %v877, 0.0
        %v922 = vadd.f32 %v920, %v921
        %v923 = vrot.slane %v922, 4
        %v924 = vadd.f32 %v922, %v923
        %v925 = vrot.slane %v924, 2
        %v926 = vadd.f32 %v924, %v925
        %v927 = vrot.slane %v926, 1
        %v928 = vadd.f32 %v926, %v927
        %v929 = vsel %vm722, %v878, 0.0
        %v930 = vsel %vm722, %v879, 0.0
        %v931 = vadd.f32 %v929, %v930
        %v932 = vrot.slane %v931, 4
        %v933 = vadd.f32 %v931, %v932
        %v934 = vrot.slane %v933, 2
        %v935 = vadd.f32 %v933, %v934
        %v936 = vrot.slane %v935, 1
        %v937 = vadd.f32 %v935, %v936
        %v938 = vsel %vm722, %v880, 0.0
        %v939 = vsel %vm722, %v881, 0.0
        %v940 = vadd.f32 %v938, %v939
        %v941 = vrot.slane %v940, 4
        %v942 = vadd.f32 %v940, %v941
        %v943 = vrot.slane %v942, 2
        %v944 = vadd.f32 %v942, %v943
        %v945 = vrot.slane %v944, 1
        %v946 = vadd.f32 %v944, %v945
        %v947 = vsel %vm722, %v882, 0.0
        %v948 = vsel %vm722, %v883, 0.0
        %v949 = vadd.f32 %v947, %v948
        %v950 = vrot.slane %v949, 4
        %v951 = vadd.f32 %v949, %v950
        %v952 = vrot.slane %v951, 2
        %v953 = vadd.f32 %v951, %v952
        %v954 = vrot.slane %v953, 1
        %v955 = vadd.f32 %v953, %v954
        %v956 = vrcp.pop 16.0
        %v957 = vmul.f32 16.0, %v956
        %v958 = vsub.f32 1.0, %v957
        %v959 = vmul.f32 %v956, %v958
        %v960 = vadd.f32 %v956, %v959
        %vm961 = vweird.f32 %v956
        %v962 = vsel %vm961, %v956, %v960
        %v963 = vmul.f32 %v892, %v962
        %v964 = vmul.f32 %v901, %v962
        %v965 = vmul.f32 %v910, %v962
        %v966 = vmul.f32 %v919, %v962
        %v967 = vmul.f32 %v928, %v962
        %v968 = vmul.f32 %v937, %v962
        %v969 = vmul.f32 %v946, %v962
        %v970 = vmul.f32 %v955, %v962
        %v971 = vld [vmem:[#allocation5 + $0x50] sm:$0xff]
        %v972 = vld [vmem:[#allocation5 + $0x58] sm:$0xff]
        %v973 = vld [vmem:[#allocation5 + $0x60] sm:$0xff]
        %v974 = vld [vmem:[#allocation5 + $0x68] sm:$0xff]
        %v975 = vld [vmem:[#allocation5 + $0x70] sm:$0xff]
        %v976 = vld [vmem:[#allocation5 + $0x78] sm:$0xff]
        %v977 = vld [vmem:[#allocation5 + $0x80] sm:$0xff]
        %v978 = vld [vmem:[#allocation5 + $0x88] sm:$0xff]
        %v979 = vld [vmem:[#allocation5 + $0x90] sm:$0x1]
        %v980 = vperm.slane %v979, 0
        %vm989 = vcmask 1041409
        %v990 = vsel %vm989, %v964, %v963
        %vm991 = vcmask 1042434
        %v992 = vsel %vm991, %v965, %v990
        %vm993 = vcmask 1043459
        %v994 = vsel %vm993, %v966, %v992
        %vm995 = vcmask 1044484
        %v996 = vsel %vm995, %v967, %v994
        %vm997 = vcmask 1045509
        %v998 = vsel %vm997, %v968, %v996
        %vm999 = vcmask 1046534
        %v1000 = vsel %vm999, %v969, %v998
        %vm1001 = vcmask 1047559
        %v1002 = vsel %vm1001, %v970, %v1000
        %v1003 = vsel %vm722, %v1002, 0
        %1005 = vmatpush.msra.mxu0 0.0
        %1006 = vmatpush.msra.mxu0 0.0
        %1007 = vmatpush.msra.mxu0 0.0
        %1008 = vmatpush.msra.mxu0 0.0
        %1009 = vmatpush.msra.mxu0 0.0
        %1010 = vmatpush.msra.mxu0 0.0
        %1011 = vmatpush.msra.mxu0 0.0
        %1012 = vmatpush.msra.mxu0 0.0
        %1013 = vmatpush.msra.mxu0 %v978
        %1014 = vmatpush.msra.mxu0 %v977
        %1015 = vmatpush.msra.mxu0 %v976
        %1016 = vmatpush.msra.mxu0 %v975
        %1017 = vmatpush.msra.mxu0 %v974
        %1018 = vmatpush.msra.mxu0 %v973
        %1019 = vmatpush.msra.mxu0 %v972
        %1020 = vmatpush.msra.mxu0 %v971
        %1021 = vmatmul.f32.gmra.mxu0 %v1003
        %v1022 = vpop.f32.mrf.mxu0
        %v1023 = vadd.f32 %v980, %v1022
        %1024 = vdwg.mxu0
        %v1025 = vld [vmem:[#allocation5 + $0x98] sm:$0xff]
        %v1026 = vld [vmem:[#allocation5 + $0xa0] sm:$0xff]
        %v1027 = vld [vmem:[#allocation5 + $0xa8] sm:$0xff]
        %v1028 = vld [vmem:[#allocation5 + $0xb0] sm:$0xff]
        %v1029 = vld [vmem:[#allocation5 + $0xb8] sm:$0x1]
        %v1030 = vperm.slane %v1029, 0
        %vm1031 = vcmask 261120
        %v1033 = vsel %vm1031, %v1023, 0
        %1035 = vmatpush.msra.mxu0 0.0
        %1036 = vmatpush.msra.mxu0 0.0
        %1037 = vmatpush.msra.mxu0 0.0
        %1038 = vmatpush.msra.mxu0 0.0
        %1039 = vmatpush.msra.mxu0 0.0
        %1040 = vmatpush.msra.mxu0 0.0
        %1041 = vmatpush.msra.mxu0 0.0
        %1042 = vmatpush.msra.mxu0 0.0
        %1043 = vmatpush.msra.mxu0 0.0
        %1044 = vmatpush.msra.mxu0 0.0
        %1045 = vmatpush.msra.mxu0 0.0
        %1046 = vmatpush.msra.mxu0 0.0
        %1047 = vmatpush.msra.mxu0 %v1028
        %1048 = vmatpush.msra.mxu0 %v1027
        %1049 = vmatpush.msra.mxu0 %v1026
        %1050 = vmatpush.msra.mxu0 %v1025
        %1051 = vmatmul.f32.gmra.mxu0 %v1033
        %v1052 = vpop.f32.mrf.mxu0
        %v1053 = vadd.f32 %v1030, %v1052
        %1054 = vdwg.mxu0
        %vm1055 = vcmp.gt.f32.partialorder %v1053, 0.0
        %v1056 = vmul.f32 %v1053, 0.01
        %v1057 = vsel %vm1055, %v1053, %v1056
        %v1058 = vld [vmem:[#allocation5 + $0xc0] sm:$0xff]
        %v1059 = vld [vmem:[#allocation5 + $0xc8] sm:$0xff]
        %v1060 = vld [vmem:[#allocation5 + $0xd0] sm:$0xff]
        %v1061 = vld [vmem:[#allocation5 + $0xd8] sm:$0xff]
        %v1062 = vld [vmem:[#allocation5 + $0xe0] sm:$0xff]
        %v1063 = vld [vmem:[#allocation5 + $0xe8] sm:$0xff]
        %v1064 = vld [vmem:[#allocation5 + $0xf0] sm:$0xff]
        %v1065 = vld [vmem:[#allocation5 + $0xf8] sm:$0xff]
        %v1066 = vld [vmem:[#allocation5 + $0x100] sm:$0x1]
        %v1067 = vperm.slane %v1066, 0
        %v1069 = vsel %vm722, %v1057, 0
        %1071 = vmatpush.msra.mxu0 0.0
        %1072 = vmatpush.msra.mxu0 0.0
        %1073 = vmatpush.msra.mxu0 0.0
        %1074 = vmatpush.msra.mxu0 0.0
        %1075 = vmatpush.msra.mxu0 0.0
        %1076 = vmatpush.msra.mxu0 0.0
        %1077 = vmatpush.msra.mxu0 0.0
        %1078 = vmatpush.msra.mxu0 0.0
        %1079 = vmatpush.msra.mxu0 %v1065
        %1080 = vmatpush.msra.mxu0 %v1064
        %1081 = vmatpush.msra.mxu0 %v1063
        %1082 = vmatpush.msra.mxu0 %v1062
        %1083 = vmatpush.msra.mxu0 %v1061
        %1084 = vmatpush.msra.mxu0 %v1060
        %1085 = vmatpush.msra.mxu0 %v1059
        %1086 = vmatpush.msra.mxu0 %v1058
        %1087 = vmatmul.f32.gmra.mxu0 %v1069
        %v1088 = vpop.f32.mrf.mxu0
        %v1089 = vadd.f32 %v1067, %v1088
        %1090 = vdwg.mxu0
        %vm1091 = vcmp.gt.f32.partialorder %v1089, 0.0
        %v1092 = vmul.f32 %v1089, 0.01
        %v1093 = vsel %vm1091, %v1089, %v1092
        %v1094 = vld [vmem:[#allocation5 + $0x108] sm:$0xff]
        %v1095 = vld [vmem:[#allocation5 + $0x110] sm:$0xff]
        %v1096 = vld [vmem:[#allocation5 + $0x118] sm:$0xff]
        %v1097 = vld [vmem:[#allocation5 + $0x120] sm:$0xff]
        %v1098 = vld [vmem:[#allocation5 + $0x128] sm:$0xff]
        %v1099 = vld [vmem:[#allocation5 + $0x130] sm:$0xff]
        %v1100 = vld [vmem:[#allocation5 + $0x138] sm:$0xff]
        %v1101 = vld [vmem:[#allocation5 + $0x140] sm:$0xff]
        %v1102 = vld [vmem:[#allocation5 + $0x148] sm:$0x1]
        %v1103 = vperm.slane %v1102, 0
        %v1105 = vsel %vm722, %v1093, 0
        %1107 = vmatpush.msra.mxu0 0.0
        %1108 = vmatpush.msra.mxu0 0.0
        %1109 = vmatpush.msra.mxu0 0.0
        %1110 = vmatpush.msra.mxu0 0.0
        %1111 = vmatpush.msra.mxu0 0.0
        %1112 = vmatpush.msra.mxu0 0.0
        %1113 = vmatpush.msra.mxu0 0.0
        %1114 = vmatpush.msra.mxu0 0.0
        %1115 = vmatpush.msra.mxu0 %v1101
        %1116 = vmatpush.msra.mxu0 %v1100
        %1117 = vmatpush.msra.mxu0 %v1099
        %1118 = vmatpush.msra.mxu0 %v1098
        %1119 = vmatpush.msra.mxu0 %v1097
        %1120 = vmatpush.msra.mxu0 %v1096
        %1121 = vmatpush.msra.mxu0 %v1095
        %1122 = vmatpush.msra.mxu0 %v1094
        %1123 = vmatmul.f32.gmra.mxu0 %v1105
        %v1124 = vpop.f32.mrf.mxu0
        %v1125 = vadd.f32 %v1103, %v1124
        %1126 = vdwg.mxu0
        %1127 = vst [vmem:[%s177] sm:$0xff] %v1125
        %s1128 = sand.u32 %s75, 1
        %s1129 = scalar_lea.sflag [#allocation4], %s1128
        %s1130 = sand.u32 %s75, 1
        %s1131 = smul.addr %s1130, 8
        %s1132 = scalar_lea.vmem [#allocation7], %s1131
        // Predicated region
        $region37: #{tpu_custom_call.1} parent=27 // pred_check
          %p1133 = pneg %p85
        $region38: #{tpu_custom_call.1} parent=27 // pred_check_branch
          %1135 = sbr.rel (%p1133) target = $region40
        $region39: #{tpu_custom_call.1} parent=27 // pred_region
          %1137 = vsyncadd %s1129, 0
          %s1138 = smul.addr %s20, 8
          %s1139 = scalar_lea.hbm %s2, %s1138
          %s1141 = sshll.u32 %s1132, 4
          %s1142 = int_to_ptr.vmem [resolvable:$true] %s1141
          %s1143 = sshll.u32 %s1139, 4
          %s1144 = int_to_ptr.hbm [resolvable:$true] %s1143
          %1146 = dma.vmem_to_hbm [thread:$0]  %s1142, 128, %s1144, %s1129
        $region40: #{tpu_custom_call.1} parent=27 // pred_fallthru
          _
      $region28: #{tpu_custom_call.1} parent=5 // pred_fallthru
        _
      %p1147 = scmp.le.s32.totalorder 2, %s15
      // Predicated region
      $region41: #{tpu_custom_call.1} parent=5 // pred_check
        %p1148 = pneg %p1147
      $region42: #{tpu_custom_call.1} parent=5 // pred_check_branch
        %1150 = sbr.rel (%p1148) target = $region44
      $region43: #{tpu_custom_call.1} parent=5 // pred_region
        %s1151 = ssub.s32 %s15, 2
        // Predicated region
        $region45: #{tpu_custom_call.1} parent=43 // pred_check
          %p1152 = pneg %p91
        $region46: #{tpu_custom_call.1} parent=43 // pred_check_branch
          %1154 = sbr.rel (%p1152) target = $region48
        $region47: #{tpu_custom_call.1} parent=43 // pred_region
          %s1155 = sand.u32 %s76, 1
          %s1156 = scalar_lea.sflag [#allocation4], %s1155
          %s1157 = sand.u32 %s76, 1
          %s1158 = smul.addr %s1157, 8
          %s1159 = scalar_lea.vmem [#allocation7], %s1158
          %1161 = dma.done %s1156, 128
        $region48: #{tpu_custom_call.1} parent=43 // pred_fallthru
          _
      $region44: #{tpu_custom_call.1} parent=5 // pred_fallthru
        _
    $region6: #{tpu_custom_call.1} parent=1 // loop_footer
      %s19 = sadd.s32 1, %s15
    $region7: #{tpu_custom_call.1} parent=1 // loop_footer_branch
      %14 = sbr.rel target = $region3
    $region8: #{tpu_custom_call.1} parent=1 // loop_exit
      _
    %1162 = vsyncpa [#allocation3], 1
    %s1163 = scalar_lea.sflag [#allocation3], 1
    %1164 = vsyncpa %s1163, 1
    %1165 = vsyncpa [#allocation6], 1
    %1166 = vsyncpa [#allocation4], 1
    %s1167 = scalar_lea.sflag [#allocation4], 1
    %1168 = vsyncpa %s1167, 1

</llo_original>
